<compile_context>
chip_gen: v7x
topology: tpu7x:2x2x1
jax: 0.10.0
libtpu: 0.0.40
codegen_flags: <defaults>
</compile_context>

<pallas_src>
import functools

import numpy as np
import jax
import jax.numpy as jnp
from jax.experimental import pallas as pl
from jax.experimental.pallas import tpu as pltpu


# ------------------------------------------------------------------- kernel ---

def _fused_kernel(x_ref, w_ref, b_ref, g_ref, be_ref, p_ref, o_ref, *,
                  bsz, kh, kw, wp, hout, wout, inv_count, eps, shift_down):
    """Fused conv + bias + GroupNorm (+ optional down-shift) for `bsz` samples.

    x_ref : (B, Cin, Hp*Wp)     bf16  zero-padded input, spatially flattened
    w_ref : (kh*kw, Cout, Cin)  bf16  conv weight, tap-major
    b_ref : (Cout, 1)           f32   conv bias
    g_ref : (Cout, 1)           f32   GroupNorm scale
    be_ref: (Cout, 1)           f32   GroupNorm shift
    p_ref : (Cout, Cout)        f32   P[c, c'] = 1 iff same GroupNorm group
    o_ref : (B, Cout, H*W)      bf16  final module output, spatially flattened
    """
    bias = b_ref[...]
    gamma = g_ref[...]
    beta = be_ref[...]
    pmat = p_ref[...]
    conv_len = (hout - 1) * wp + wout          # last valid padded-coord column + 1

    for s in range(bsz):
        xs = x_ref[s]                          # (Cin, Hp*Wp) bf16

        # --- conv: one MXU matmul per tap on a statically lane-offset window of the
        #     flattened padded image.  off + conv_len <= Hp*Wp for every tap, so the
        #     slices never wrap and no validity mask is needed. ---
        acc = None
        for dy in range(kh):
            for dx in range(kw):
                t = dy * kw + dx
                off = dy * wp + dx
                d = jnp.dot(w_ref[t], xs[:, off:off + conv_len],
                            preferred_element_type=jnp.float32)   # (Cout, conv_len) f32
                acc = d if acc is None else acc + d

        # --- compact padded (Hp, Wp) flat coords -> final (H, W) flat coords in VMEM,
        #     then add the bias on the smaller slab. ---
        y = jnp.concatenate(
            [acc[:, r * wp:r * wp + wout] for r in range(hout)], axis=1)   # (Cout, H*W)
        y = y + bias

        # --- GroupNorm, single fused pass (no mask needed any more):
        #     channels on sublanes, spatial on lanes -> lane reductions + one small
        #     one-hot matmul on the stacked (Cout, 2) statistics. ---
        s1 = jnp.sum(y, axis=1, keepdims=True)
        s2 = jnp.sum(y * y, axis=1, keepdims=True)
        gstats = jnp.dot(pmat, jnp.concatenate([s1, s2], axis=1),
                         preferred_element_type=jnp.float32) * inv_count   # (Cout, 2)
        mean = gstats[:, 0:1]
        var = jnp.maximum(gstats[:, 1:2] - mean * mean, 0.0)
        yn = (y - mean) * jax.lax.rsqrt(var + eps) * gamma + beta

        if shift_down:
            # down_shift (applied after the norm, as in torch): drop the last spatial
            # row and prepend a literal zero row.
            yn = jnp.concatenate(
                [jnp.zeros((yn.shape[0], wout), yn.dtype),
                 yn[:, :(hout - 1) * wout]], axis=1)

        o_ref[s] = yn.astype(o_ref.dtype)


# ------------------------------------------------------------------ wrapper ---

def down_shifted_conv2d(params, x, *, shift_output_down=False, eps=1e-6,
                        out_dtype=jnp.bfloat16):
    """DownShiftedConv2d forward (NCHW in / NCHW out), norm='group_norm', stride 1."""
    w = params['w']                      # (Cout, Cin, KH, KW)  torch Conv2d layout
    b = params['b']                      # (Cout,)
    gamma, beta = params['gamma'], params['beta']

    n, cin, h, wdim = x.shape
    cout, _, kh, kw = w.shape
    groups = min(cout // 4, 32)          # as in the torch module
    assert cout % groups == 0
    cg = cout // groups

    pad_lr = (kw - 1) // 2
    pad_t = kh - 1
    hp, wp = h + pad_t, wdim + 2 * pad_lr
    hout, wout = hp - kh + 1, wp - kw + 1      # == h, w for stride 1 / odd kw
    hwp, hw = hp * wp, hout * wout
    conv_len = (hout - 1) * wp + wout

    # pad + flatten + bf16 cast: one fused XLA pass; bf16 halves HBM->VMEM input traffic.
    xp = jnp.pad(x, ((0, 0), (0, 0), (pad_t, 0), (pad_lr, pad_lr)))
    xpf = xp.reshape(n, cin, hwp).astype(jnp.bfloat16)

    # weight tap-major: (kh*kw, Cout, Cin); tap index t = dy*kw + dx
    w2 = jnp.transpose(w, (2, 3, 0, 1)).reshape(kh * kw, cout, cin).astype(jnp.bfloat16)
    b2 = b.reshape(cout, 1).astype(jnp.float32)
    g2 = gamma.reshape(cout, 1).astype(jnp.float32)
    be2 = beta.reshape(cout, 1).astype(jnp.float32)

    # same-group membership matrix for the GroupNorm channel aggregation
    cid = jnp.arange(cout) // cg
    pmat = (cid[:, None] == cid[None, :]).astype(jnp.float32)    # (Cout, Cout)

    # --- batch block size B from a VMEM budget portable to v7x (64 MiB / TC) ---
    stream_per_sample = 2 * (cin * hwp * 2) + 2 * (cout * hw * 2)   # dbl-buffered in/out
    live_per_sample = cout * conv_len * 4 + 2 * cout * hw * 4 + cin * hwp * 2
    resident = kh * kw * cout * cin * 2 + 3 * cout * 4 + cout * cout * 4
    budget = 40 << 20                      # leaves headroom under the 48 MiB cap below
    b_cap = max(1, (budget - resident - 2 * live_per_sample) // max(stream_per_sample, 1))
    b_pipe = max(1, n // min(4, n))        # keep >= min(4, N) grid steps for pipelining
    bsz = 1
    for cand in range(1, n + 1):
        if n % cand == 0 and cand <= b_cap and cand <= b_pipe:
            bsz = cand

    vmem_limit = int(min(
        resident + 2 * live_per_sample + bsz * stream_per_sample + (4 << 20), 48 << 20))
    vmem_limit = max(vmem_limit, 8 << 20)

    kernel = functools.partial(
        _fused_kernel, bsz=bsz, kh=kh, kw=kw, wp=wp, hout=hout, wout=wout,
        inv_count=1.0 / float(cg * hout * wout), eps=float(eps),
        shift_down=bool(shift_output_down))

    out = pl.pallas_call(
        kernel,
        out_shape=jax.ShapeDtypeStruct((n, cout, hw), out_dtype),
        grid=(n // bsz,),
        in_specs=[
            pl.BlockSpec((bsz, cin, hwp), lambda i: (i, 0, 0)),
            pl.BlockSpec((kh * kw, cout, cin), lambda i: (0, 0, 0)),
            pl.BlockSpec((cout, 1), lambda i: (0, 0)),
            pl.BlockSpec((cout, 1), lambda i: (0, 0)),
            pl.BlockSpec((cout, 1), lambda i: (0, 0)),
            pl.BlockSpec((cout, cout), lambda i: (0, 0)),
        ],
        out_specs=pl.BlockSpec((bsz, cout, hw), lambda i: (i, 0, 0)),
        compiler_params=pltpu.CompilerParams(
            dimension_semantics=("parallel",),
            vmem_limit_bytes=vmem_limit),
    )(xpf, w2, b2, g2, be2, pmat)

    # compaction and the optional down-shift already happened inside the kernel
    return out.reshape(n, cout, hout, wout)


# -------------------------------------------------------- pure-JAX reference ---

def _reference(params, x, *, shift_output_down=False, eps=1e-6):
    w, b = params['w'], params['b']
    kh, kw = int(w.shape[2]), int(w.shape[3])
    xp = jnp.pad(x, ((0, 0), (0, 0), (kh - 1, 0), ((kw - 1) // 2, (kw - 1) // 2)))
    y = jax.lax.conv_general_dilated(
        xp, w, window_strides=(1, 1), padding='VALID',
        dimension_numbers=('NCHW', 'OIHW', 'NCHW'))
    y = y + b.reshape(1, -1, 1, 1)
    n, c, hh, ww = y.shape
    g = min(c // 4, 32)
    yg = y.reshape(n, g, -1)
    mean = jnp.mean(yg, axis=2, keepdims=True)
    var = jnp.mean(jnp.square(yg - mean), axis=2, keepdims=True)
    yn = ((yg - mean) / jnp.sqrt(var + eps)).reshape(n, c, hh, ww)
    yn = yn * params['gamma'].reshape(1, -1, 1, 1) + params['beta'].reshape(1, -1, 1, 1)
    if shift_output_down:
        yn = jnp.pad(yn[:, :, :hh - 1, :], ((0, 0), (0, 0), (1, 0), (0, 0)))
    return yn


# --------------------------------------------------------------------- main ---

if __name__ == "__main__":
    N, CIN, H, W = 2, 4, 16, 16
    COUT, FS = 32, (2, 3)                 # DownShiftedConv2d defaults: filter_size=(2,3)

    key = jax.random.PRNGKey(0)
    kx, kkw, kkb, kg, kbe = jax.random.split(key, 5)
    x = jax.random.normal(kx, (N, CIN, H, W), jnp.float32)
    s = 1.0 / np.sqrt(CIN * FS[0] * FS[1])
    params = {
        'w': jax.random.uniform(kkw, (COUT, CIN, FS[0], FS[1]), jnp.float32, -s, s),
        'b': jax.random.uniform(kkb, (COUT,), jnp.float32, -s, s),
        'gamma': 1.0 + 0.1 * jax.random.normal(kg, (COUT,), jnp.float32),
        'beta': 0.1 * jax.random.normal(kbe, (COUT,), jnp.float32),
    }

    for shift in (True, False):
        fwd = jax.jit(functools.partial(down_shifted_conv2d, shift_output_down=shift))
        out = jax.block_until_ready(fwd(params, x))
        assert out.shape == (N, COUT, H, W), out.shape
        assert bool(jnp.all(jnp.isfinite(out.astype(jnp.float32))))
        ref = _reference(params, x, shift_output_down=shift)
        err = float(jnp.max(jnp.abs(out.astype(jnp.float32) - ref)))
        assert err < 1e-1, f"max abs error vs f32 reference too large: {err}"

    print("KERNEL_OK")
</pallas_src>

<mosaic_0001>
module attributes {stable_mosaic.version = 11 : i64} {
  func.func @_fused_kernel(%arg0: i32, %arg1: memref<1x4x306xbf16, #tpu.memory_space<vmem>>, %arg2: memref<6x32x4xbf16, #tpu.memory_space<vmem>>, %arg3: memref<32x1xf32, #tpu.memory_space<vmem>>, %arg4: memref<32x1xf32, #tpu.memory_space<vmem>>, %arg5: memref<32x1xf32, #tpu.memory_space<vmem>>, %arg6: memref<32x32xf32, #tpu.memory_space<vmem>>, %arg7: memref<1x32x256xbf16, #tpu.memory_space<vmem>>) attributes {dimension_semantics = [#tpu.dimension_semantics<parallel>], iteration_bounds = array<i64: 2>, scalar_prefetch = 0 : i64, scratch_operands = 0 : i64, tpu.core_type = #tpu.core_type<tc>, window_params = [{transform_indices = @transform_0, window_bounds = array<i64: 1, 4, 306>}, {pipeline_mode = #tpu.pipeline_mode<synchronous>, transform_indices = @transform_1, window_bounds = array<i64: 6, 32, 4>}, {pipeline_mode = #tpu.pipeline_mode<synchronous>, transform_indices = @transform_2, window_bounds = array<i64: 32, 1>}, {pipeline_mode = #tpu.pipeline_mode<synchronous>, transform_indices = @transform_3, window_bounds = array<i64: 32, 1>}, {pipeline_mode = #tpu.pipeline_mode<synchronous>, transform_indices = @transform_4, window_bounds = array<i64: 32, 1>}, {pipeline_mode = #tpu.pipeline_mode<synchronous>, transform_indices = @transform_5, window_bounds = array<i64: 32, 32>}, {transform_indices = @transform_6, window_bounds = array<i64: 1, 32, 256>}]} {
    %c0 = arith.constant 0 : index
    %c0_0 = arith.constant 0 : index
    %0 = vector.load %arg3[%c0, %c0_0] : memref<32x1xf32, #tpu.memory_space<vmem>>, vector<32x1xf32>
    %c0_1 = arith.constant 0 : index
    %c0_2 = arith.constant 0 : index
    %1 = vector.load %arg4[%c0_1, %c0_2] : memref<32x1xf32, #tpu.memory_space<vmem>>, vector<32x1xf32>
    %c0_3 = arith.constant 0 : index
    %c0_4 = arith.constant 0 : index
    %2 = vector.load %arg5[%c0_3, %c0_4] : memref<32x1xf32, #tpu.memory_space<vmem>>, vector<32x1xf32>
    %c0_5 = arith.constant 0 : index
    %c0_6 = arith.constant 0 : index
    %3 = vector.load %arg6[%c0_5, %c0_6] : memref<32x32xf32, #tpu.memory_space<vmem>>, vector<32x32xf32>
    %c0_7 = arith.constant 0 : index
    %c0_8 = arith.constant 0 : index
    %c0_9 = arith.constant 0 : index
    %4 = vector.load %arg1[%c0_7, %c0_8, %c0_9] : memref<1x4x306xbf16, #tpu.memory_space<vmem>>, vector<1x4x306xbf16>
    %5 = vector.shape_cast %4 : vector<1x4x306xbf16> to vector<4x306xbf16>
    %c0_10 = arith.constant 0 : index
    %c0_11 = arith.constant 0 : index
    %c0_12 = arith.constant 0 : index
    %6 = vector.load %arg2[%c0_10, %c0_11, %c0_12] : memref<6x32x4xbf16, #tpu.memory_space<vmem>>, vector<1x32x4xbf16>
    %7 = vector.shape_cast %6 : vector<1x32x4xbf16> to vector<32x4xbf16>
    %8 = vector.extract_strided_slice %5 {offsets = [0, 0], sizes = [4, 286], strides = [1, 1]} : vector<4x306xbf16> to vector<4x286xbf16>
    %cst = arith.constant dense<0.000000e+00> : vector<32x286xf32>
    %9 = tpu.matmul %7, %8, %cst {dimension_numbers = #tpu.dot_dimension_numbers<[1], [0], [0], [1], [0, 0, 1, 1], [], []>} : vector<32x4xbf16>, vector<4x286xbf16>, vector<32x286xf32> -> vector<32x286xf32>
    %c1 = arith.constant 1 : index
    %c0_13 = arith.constant 0 : index
    %c0_14 = arith.constant 0 : index
    %10 = vector.load %arg2[%c1, %c0_13, %c0_14] : memref<6x32x4xbf16, #tpu.memory_space<vmem>>, vector<1x32x4xbf16>
    %11 = vector.shape_cast %10 : vector<1x32x4xbf16> to vector<32x4xbf16>
    %12 = vector.extract_strided_slice %5 {offsets = [0, 1], sizes = [4, 286], strides = [1, 1]} : vector<4x306xbf16> to vector<4x286xbf16>
    %cst_15 = arith.constant dense<0.000000e+00> : vector<32x286xf32>
    %13 = tpu.matmul %11, %12, %cst_15 {dimension_numbers = #tpu.dot_dimension_numbers<[1], [0], [0], [1], [0, 0, 1, 1], [], []>} : vector<32x4xbf16>, vector<4x286xbf16>, vector<32x286xf32> -> vector<32x286xf32>
    %14 = arith.addf %9, %13 : vector<32x286xf32>
    %c2 = arith.constant 2 : index
    %c0_16 = arith.constant 0 : index
    %c0_17 = arith.constant 0 : index
    %15 = vector.load %arg2[%c2, %c0_16, %c0_17] : memref<6x32x4xbf16, #tpu.memory_space<vmem>>, vector<1x32x4xbf16>
    %16 = vector.shape_cast %15 : vector<1x32x4xbf16> to vector<32x4xbf16>
    %17 = vector.extract_strided_slice %5 {offsets = [0, 2], sizes = [4, 286], strides = [1, 1]} : vector<4x306xbf16> to vector<4x286xbf16>
    %cst_18 = arith.constant dense<0.000000e+00> : vector<32x286xf32>
    %18 = tpu.matmul %16, %17, %cst_18 {dimension_numbers = #tpu.dot_dimension_numbers<[1], [0], [0], [1], [0, 0, 1, 1], [], []>} : vector<32x4xbf16>, vector<4x286xbf16>, vector<32x286xf32> -> vector<32x286xf32>
    %19 = arith.addf %14, %18 : vector<32x286xf32>
    %c3 = arith.constant 3 : index
    %c0_19 = arith.constant 0 : index
    %c0_20 = arith.constant 0 : index
    %20 = vector.load %arg2[%c3, %c0_19, %c0_20] : memref<6x32x4xbf16, #tpu.memory_space<vmem>>, vector<1x32x4xbf16>
    %21 = vector.shape_cast %20 : vector<1x32x4xbf16> to vector<32x4xbf16>
    %22 = vector.extract_strided_slice %5 {offsets = [0, 18], sizes = [4, 286], strides = [1, 1]} : vector<4x306xbf16> to vector<4x286xbf16>
    %cst_21 = arith.constant dense<0.000000e+00> : vector<32x286xf32>
    %23 = tpu.matmul %21, %22, %cst_21 {dimension_numbers = #tpu.dot_dimension_numbers<[1], [0], [0], [1], [0, 0, 1, 1], [], []>} : vector<32x4xbf16>, vector<4x286xbf16>, vector<32x286xf32> -> vector<32x286xf32>
    %24 = arith.addf %19, %23 : vector<32x286xf32>
    %c4 = arith.constant 4 : index
    %c0_22 = arith.constant 0 : index
    %c0_23 = arith.constant 0 : index
    %25 = vector.load %arg2[%c4, %c0_22, %c0_23] : memref<6x32x4xbf16, #tpu.memory_space<vmem>>, vector<1x32x4xbf16>
    %26 = vector.shape_cast %25 : vector<1x32x4xbf16> to vector<32x4xbf16>
    %27 = vector.extract_strided_slice %5 {offsets = [0, 19], sizes = [4, 286], strides = [1, 1]} : vector<4x306xbf16> to vector<4x286xbf16>
    %cst_24 = arith.constant dense<0.000000e+00> : vector<32x286xf32>
    %28 = tpu.matmul %26, %27, %cst_24 {dimension_numbers = #tpu.dot_dimension_numbers<[1], [0], [0], [1], [0, 0, 1, 1], [], []>} : vector<32x4xbf16>, vector<4x286xbf16>, vector<32x286xf32> -> vector<32x286xf32>
    %29 = arith.addf %24, %28 : vector<32x286xf32>
    %c5 = arith.constant 5 : index
    %c0_25 = arith.constant 0 : index
    %c0_26 = arith.constant 0 : index
    %30 = vector.load %arg2[%c5, %c0_25, %c0_26] : memref<6x32x4xbf16, #tpu.memory_space<vmem>>, vector<1x32x4xbf16>
    %31 = vector.shape_cast %30 : vector<1x32x4xbf16> to vector<32x4xbf16>
    %32 = vector.extract_strided_slice %5 {offsets = [0, 20], sizes = [4, 286], strides = [1, 1]} : vector<4x306xbf16> to vector<4x286xbf16>
    %cst_27 = arith.constant dense<0.000000e+00> : vector<32x286xf32>
    %33 = tpu.matmul %31, %32, %cst_27 {dimension_numbers = #tpu.dot_dimension_numbers<[1], [0], [0], [1], [0, 0, 1, 1], [], []>} : vector<32x4xbf16>, vector<4x286xbf16>, vector<32x286xf32> -> vector<32x286xf32>
    %34 = arith.addf %29, %33 : vector<32x286xf32>
    %35 = vector.extract_strided_slice %34 {offsets = [0, 0], sizes = [32, 16], strides = [1, 1]} : vector<32x286xf32> to vector<32x16xf32>
    %36 = vector.extract_strided_slice %34 {offsets = [0, 18], sizes = [32, 16], strides = [1, 1]} : vector<32x286xf32> to vector<32x16xf32>
    %37 = vector.extract_strided_slice %34 {offsets = [0, 36], sizes = [32, 16], strides = [1, 1]} : vector<32x286xf32> to vector<32x16xf32>
    %38 = vector.extract_strided_slice %34 {offsets = [0, 54], sizes = [32, 16], strides = [1, 1]} : vector<32x286xf32> to vector<32x16xf32>
    %39 = vector.extract_strided_slice %34 {offsets = [0, 72], sizes = [32, 16], strides = [1, 1]} : vector<32x286xf32> to vector<32x16xf32>
    %40 = vector.extract_strided_slice %34 {offsets = [0, 90], sizes = [32, 16], strides = [1, 1]} : vector<32x286xf32> to vector<32x16xf32>
    %41 = vector.extract_strided_slice %34 {offsets = [0, 108], sizes = [32, 16], strides = [1, 1]} : vector<32x286xf32> to vector<32x16xf32>
    %42 = vector.extract_strided_slice %34 {offsets = [0, 126], sizes = [32, 16], strides = [1, 1]} : vector<32x286xf32> to vector<32x16xf32>
    %43 = vector.extract_strided_slice %34 {offsets = [0, 144], sizes = [32, 16], strides = [1, 1]} : vector<32x286xf32> to vector<32x16xf32>
    %44 = vector.extract_strided_slice %34 {offsets = [0, 162], sizes = [32, 16], strides = [1, 1]} : vector<32x286xf32> to vector<32x16xf32>
    %45 = vector.extract_strided_slice %34 {offsets = [0, 180], sizes = [32, 16], strides = [1, 1]} : vector<32x286xf32> to vector<32x16xf32>
    %46 = vector.extract_strided_slice %34 {offsets = [0, 198], sizes = [32, 16], strides = [1, 1]} : vector<32x286xf32> to vector<32x16xf32>
    %47 = vector.extract_strided_slice %34 {offsets = [0, 216], sizes = [32, 16], strides = [1, 1]} : vector<32x286xf32> to vector<32x16xf32>
    %48 = vector.extract_strided_slice %34 {offsets = [0, 234], sizes = [32, 16], strides = [1, 1]} : vector<32x286xf32> to vector<32x16xf32>
    %49 = vector.extract_strided_slice %34 {offsets = [0, 252], sizes = [32, 16], strides = [1, 1]} : vector<32x286xf32> to vector<32x16xf32>
    %50 = vector.extract_strided_slice %34 {offsets = [0, 270], sizes = [32, 16], strides = [1, 1]} : vector<32x286xf32> to vector<32x16xf32>
    %51 = tpu.concatenate %35, %36, %37, %38, %39, %40, %41, %42, %43, %44, %45, %46, %47, %48, %49, %50 in 1 : vector<32x16xf32>, vector<32x16xf32>, vector<32x16xf32>, vector<32x16xf32>, vector<32x16xf32>, vector<32x16xf32>, vector<32x16xf32>, vector<32x16xf32>, vector<32x16xf32>, vector<32x16xf32>, vector<32x16xf32>, vector<32x16xf32>, vector<32x16xf32>, vector<32x16xf32>, vector<32x16xf32>, vector<32x16xf32> -> vector<32x256xf32>
    %52 = vector.broadcast %0 : vector<32x1xf32> to vector<32x256xf32>
    %53 = arith.addf %51, %52 : vector<32x256xf32>
    %cst_28 = arith.constant dense<0.000000e+00> : vector<32xf32>
    %54 = vector.multi_reduction <add>, %53, %cst_28 [1] : vector<32x256xf32> to vector<32xf32>
    %55 = vector.shape_cast %54 : vector<32xf32> to vector<32x1xf32>
    %56 = arith.mulf %53, %53 : vector<32x256xf32>
    %cst_29 = arith.constant dense<0.000000e+00> : vector<32xf32>
    %57 = vector.multi_reduction <add>, %56, %cst_29 [1] : vector<32x256xf32> to vector<32xf32>
    %58 = vector.shape_cast %57 : vector<32xf32> to vector<32x1xf32>
    %59 = tpu.concatenate %55, %58 in 1 : vector<32x1xf32>, vector<32x1xf32> -> vector<32x2xf32>
    %cst_30 = arith.constant dense<0.000000e+00> : vector<32x2xf32>
    %60 = tpu.matmul %3, %59, %cst_30 {dimension_numbers = #tpu.dot_dimension_numbers<[1], [0], [0], [1], [0, 0, 1, 1], [], []>} : vector<32x32xf32>, vector<32x2xf32>, vector<32x2xf32> -> vector<32x2xf32>
    %cst_31 = arith.constant 9.765625E-4 : f32
    %61 = vector.broadcast %cst_31 : f32 to vector<32x2xf32>
    %62 = arith.mulf %60, %61 : vector<32x2xf32>
    %63 = vector.extract_strided_slice %62 {offsets = [0, 0], sizes = [32, 1], strides = [1, 1]} : vector<32x2xf32> to vector<32x1xf32>
    %64 = vector.extract_strided_slice %62 {offsets = [0, 1], sizes = [32, 1], strides = [1, 1]} : vector<32x2xf32> to vector<32x1xf32>
    %65 = arith.mulf %63, %63 : vector<32x1xf32>
    %66 = arith.subf %64, %65 : vector<32x1xf32>
    %cst_32 = arith.constant 0.000000e+00 : f32
    %67 = vector.broadcast %cst_32 : f32 to vector<32x1xf32>
    %68 = arith.maximumf %66, %67 : vector<32x1xf32>
    %69 = vector.broadcast %63 : vector<32x1xf32> to vector<32x256xf32>
    %70 = arith.subf %53, %69 : vector<32x256xf32>
    %cst_33 = arith.constant 9.99999997E-7 : f32
    %71 = vector.broadcast %cst_33 : f32 to vector<32x1xf32>
    %72 = arith.addf %68, %71 : vector<32x1xf32>
    %73 = math.rsqrt %72 : vector<32x1xf32>
    %74 = vector.broadcast %73 : vector<32x1xf32> to vector<32x256xf32>
    %75 = arith.mulf %70, %74 : vector<32x256xf32>
    %76 = vector.broadcast %1 : vector<32x1xf32> to vector<32x256xf32>
    %77 = arith.mulf %75, %76 : vector<32x256xf32>
    %78 = vector.broadcast %2 : vector<32x1xf32> to vector<32x256xf32>
    %79 = arith.addf %77, %78 : vector<32x256xf32>
    %cst_34 = arith.constant 0.000000e+00 : f32
    %80 = vector.broadcast %cst_34 : f32 to vector<32x16xf32>
    %81 = vector.extract_strided_slice %79 {offsets = [0, 0], sizes = [32, 240], strides = [1, 1]} : vector<32x256xf32> to vector<32x240xf32>
    %82 = tpu.concatenate %80, %81 in 1 : vector<32x16xf32>, vector<32x240xf32> -> vector<32x256xf32>
    %83 = arith.truncf %82 : vector<32x256xf32> to vector<32x256xbf16>
    %c0_35 = arith.constant 0 : index
    %c0_36 = arith.constant 0 : index
    %c0_37 = arith.constant 0 : index
    %84 = vector.load %arg7[%c0_35, %c0_36, %c0_37] : memref<1x32x256xbf16, #tpu.memory_space<vmem>>, vector<1x32x256xbf16>
    %85 = vector.shape_cast %84 : vector<1x32x256xbf16> to vector<32x256xbf16>
    %86 = vector.shape_cast %83 : vector<32x256xbf16> to vector<1x32x256xbf16>
    tpu.vector_store %arg7[%c0_35, %c0_36, %c0_37], %86 {strides = array<i32>} : memref<1x32x256xbf16, #tpu.memory_space<vmem>>, vector<1x32x256xbf16>,
    return
  }
  func.func @transform_0(%arg0: i32) -> (i32, i32, i32) {
    %c0_i32 = arith.constant 0 : i32
    %c0_i32_0 = arith.constant 0 : i32
    %c0_i32_1 = arith.constant 0 : i32
    return %arg0, %c0_i32, %c0_i32_0 : i32, i32, i32
  }
  func.func @transform_1(%arg0: i32) -> (i32, i32, i32) {
    %c0_i32 = arith.constant 0 : i32
    %c0_i32_0 = arith.constant 0 : i32
    %c0_i32_1 = arith.constant 0 : i32
    %c0_i32_2 = arith.constant 0 : i32
    return %c0_i32, %c0_i32_0, %c0_i32_1 : i32, i32, i32
  }
  func.func @transform_2(%arg0: i32) -> (i32, i32) {
    %c0_i32 = arith.constant 0 : i32
    %c0_i32_0 = arith.constant 0 : i32
    %c0_i32_1 = arith.constant 0 : i32
    return %c0_i32, %c0_i32_0 : i32, i32
  }
  func.func @transform_3(%arg0: i32) -> (i32, i32) {
    %c0_i32 = arith.constant 0 : i32
    %c0_i32_0 = arith.constant 0 : i32
    %c0_i32_1 = arith.constant 0 : i32
    return %c0_i32, %c0_i32_0 : i32, i32
  }
  func.func @transform_4(%arg0: i32) -> (i32, i32) {
    %c0_i32 = arith.constant 0 : i32
    %c0_i32_0 = arith.constant 0 : i32
    %c0_i32_1 = arith.constant 0 : i32
    return %c0_i32, %c0_i32_0 : i32, i32
  }
  func.func @transform_5(%arg0: i32) -> (i32, i32) {
    %c0_i32 = arith.constant 0 : i32
    %c0_i32_0 = arith.constant 0 : i32
    %c0_i32_1 = arith.constant 0 : i32
    return %c0_i32, %c0_i32_0 : i32, i32
  }
  func.func @transform_6(%arg0: i32) -> (i32, i32, i32) {
    %c0_i32 = arith.constant 0 : i32
    %c0_i32_0 = arith.constant 0 : i32
    %c0_i32_1 = arith.constant 0 : i32
    return %arg0, %c0_i32, %c0_i32_0 : i32, i32, i32
  }
}

</mosaic_0001>

<llo_original>
// kernel: down_shifted_conv2d.1
$region0: #{down_shifted_conv2d.1}
  #allocation0 [shape = 'u32[]', space=smem, size = 0x4, offset = 0x4, fixed_abs, tag = 'smem constant byte address 0x4 - core index']
  #allocation1 [shape = 'u32[144,128]{1,0:T(1,128)}', space=vmem, size = 0x12000, scoped, tag = 'internal scratch']
  %s0 = inlined_call_operand.vmem [shape: bf16[2,4,306], index: 0, kind: input, shape index: {}]
  %s1 = inlined_call_operand.vmem [shape: bf16[6,32,4], index: 1, kind: input, shape index: {}]
  %s2 = inlined_call_operand.vmem [shape: f32[32,1], index: 2, kind: input, shape index: {}]
  %s3 = inlined_call_operand.vmem [shape: f32[32,1], index: 3, kind: input, shape index: {}]
  %s4 = inlined_call_operand.vmem [shape: f32[32,1], index: 4, kind: input, shape index: {}]
  %s5 = inlined_call_operand.vmem [shape: f32[32,32], index: 5, kind: input, shape index: {}]
  %s6 = inlined_call_operand.vmem [shape: bf16[2,32,256], index: 6, kind: output, shape index: {}]
  %s7 = sld [smem:[#allocation0]]
  $region57: #{down_shifted_conv2d.1} parent=0
    _
  %s9 = ssub.s32 1, %s7
  %s10 = scalar_select 0, %s9, %s7
  loop: start=0, step=1, limit=4
  $region2: #{down_shifted_conv2d.1} parent=0 // loop_pre_header
    _
  $region3: #{down_shifted_conv2d.1} parent=0 // loop_header
    %s12 = sphi 0, %s16
    %p13 = scmp.ge.s32.totalorder %s12, 4
    %s22 = sphi 0, %s24
    %s25 = sphi 0, %s22
    %s26 = sphi 0, %s25
    %s42 = sphi 0, %s26
    %s46 = sphi 0, %s46
    %s48 = sphi 0, %s46
    %s49 = sphi 0, %s48
    %s63 = sphi 0, %s49
    %s67 = sphi 0, %s67
    %s69 = sphi 0, %s67
    %s70 = sphi 0, %s69
    %s84 = sphi 0, %s70
    %s88 = sphi 0, %s88
    %s90 = sphi 0, %s88
    %s91 = sphi 0, %s90
    %s105 = sphi 0, %s91
    %s109 = sphi 0, %s109
    %s111 = sphi 0, %s109
    %s112 = sphi 0, %s111
    %s126 = sphi 0, %s112
    %s130 = sphi 0, %s130
    %s132 = sphi 0, %s130
    %s133 = sphi 0, %s132
    %s147 = sphi 0, %s133
    %s153 = sphi 0, %s155
    %s156 = sphi 0, %s153
    %s157 = sphi 0, %s156
    %s173 = sphi 0, %s157
  $region4: #{down_shifted_conv2d.1} parent=0 // loop_header_branch
    %15 = sbr.rel (%p13) target = $region8
  $region5: #{down_shifted_conv2d.1} parent=0 // loop_body
    %s17 = ssub.s32 %s12, 1
    %s18 = ssub.s32 %s12, 2
    %s19 = sadd.s32 %s12, 1
    %s20 = ssub.s32 %s12, %s19
    %p21 = scmp.eq.s32.totalorder %s20, 0
    %s23 = sadd.s32 %s22, 1
    %s24 = scalar_select %p21, %s22, %s23
    %p27 = pneg %p21
    %p28 = scmp.eq.s32.totalorder %s12, 1
    %p29 = por %p27, %p28
    %p30 = scmp.ne.s32.totalorder %s22, %s25
    %p31 = scmp.eq.s32.totalorder %s12, 0
    %p32 = por %p30, %p31
    %p33 = scmp.ne.s32.totalorder %s22, %s25
    %p34 = scmp.eq.s32.totalorder %s17, 1
    %p35 = por %p33, %p34
    %p36 = scmp.ne.s32.totalorder %s25, %s26
    %p37 = scmp.eq.s32.totalorder %s17, 0
    %p38 = por %p36, %p37
    %p39 = scmp.ne.s32.totalorder %s25, %s26
    %p40 = scmp.eq.s32.totalorder %s18, 1
    %p41 = por %p39, %p40
    %p43 = scmp.ne.s32.totalorder %s26, %s42
    %p44 = scmp.eq.s32.totalorder %s18, 0
    %p45 = por %p43, %p44
    %s47 = sadd.s32 %s46, 1
    %p50 = scmp.eq.s32.totalorder %s12, 1
    %p51 = scmp.ne.s32.totalorder %s46, %s48
    %p52 = scmp.eq.s32.totalorder %s12, 0
    %p53 = por %p51, %p52
    %p54 = scmp.ne.s32.totalorder %s46, %s48
    %p55 = scmp.eq.s32.totalorder %s17, 1
    %p56 = por %p54, %p55
    %p57 = scmp.ne.s32.totalorder %s48, %s49
    %p58 = scmp.eq.s32.totalorder %s17, 0
    %p59 = por %p57, %p58
    %p60 = scmp.ne.s32.totalorder %s48, %s49
    %p61 = scmp.eq.s32.totalorder %s18, 1
    %p62 = por %p60, %p61
    %p64 = scmp.ne.s32.totalorder %s49, %s63
    %p65 = scmp.eq.s32.totalorder %s18, 0
    %p66 = por %p64, %p65
    %s68 = sadd.s32 %s67, 1
    %p71 = scmp.eq.s32.totalorder %s12, 1
    %p72 = scmp.ne.s32.totalorder %s67, %s69
    %p73 = scmp.eq.s32.totalorder %s12, 0
    %p74 = por %p72, %p73
    %p75 = scmp.ne.s32.totalorder %s67, %s69
    %p76 = scmp.eq.s32.totalorder %s17, 1
    %p77 = por %p75, %p76
    %p78 = scmp.ne.s32.totalorder %s69, %s70
    %p79 = scmp.eq.s32.totalorder %s17, 0
    %p80 = por %p78, %p79
    %p81 = scmp.ne.s32.totalorder %s69, %s70
    %p82 = scmp.eq.s32.totalorder %s18, 1
    %p83 = por %p81, %p82
    %p85 = scmp.ne.s32.totalorder %s70, %s84
    %p86 = scmp.eq.s32.totalorder %s18, 0
    %p87 = por %p85, %p86
    %s89 = sadd.s32 %s88, 1
    %p92 = scmp.eq.s32.totalorder %s12, 1
    %p93 = scmp.ne.s32.totalorder %s88, %s90
    %p94 = scmp.eq.s32.totalorder %s12, 0
    %p95 = por %p93, %p94
    %p96 = scmp.ne.s32.totalorder %s88, %s90
    %p97 = scmp.eq.s32.totalorder %s17, 1
    %p98 = por %p96, %p97
    %p99 = scmp.ne.s32.totalorder %s90, %s91
    %p100 = scmp.eq.s32.totalorder %s17, 0
    %p101 = por %p99, %p100
    %p102 = scmp.ne.s32.totalorder %s90, %s91
    %p103 = scmp.eq.s32.totalorder %s18, 1
    %p104 = por %p102, %p103
    %p106 = scmp.ne.s32.totalorder %s91, %s105
    %p107 = scmp.eq.s32.totalorder %s18, 0
    %p108 = por %p106, %p107
    %s110 = sadd.s32 %s109, 1
    %p113 = scmp.eq.s32.totalorder %s12, 1
    %p114 = scmp.ne.s32.totalorder %s109, %s111
    %p115 = scmp.eq.s32.totalorder %s12, 0
    %p116 = por %p114, %p115
    %p117 = scmp.ne.s32.totalorder %s109, %s111
    %p118 = scmp.eq.s32.totalorder %s17, 1
    %p119 = por %p117, %p118
    %p120 = scmp.ne.s32.totalorder %s111, %s112
    %p121 = scmp.eq.s32.totalorder %s17, 0
    %p122 = por %p120, %p121
    %p123 = scmp.ne.s32.totalorder %s111, %s112
    %p124 = scmp.eq.s32.totalorder %s18, 1
    %p125 = por %p123, %p124
    %p127 = scmp.ne.s32.totalorder %s112, %s126
    %p128 = scmp.eq.s32.totalorder %s18, 0
    %p129 = por %p127, %p128
    %s131 = sadd.s32 %s130, 1
    %p134 = scmp.eq.s32.totalorder %s12, 1
    %p135 = scmp.ne.s32.totalorder %s130, %s132
    %p136 = scmp.eq.s32.totalorder %s12, 0
    %p137 = por %p135, %p136
    %p138 = scmp.ne.s32.totalorder %s130, %s132
    %p139 = scmp.eq.s32.totalorder %s17, 1
    %p140 = por %p138, %p139
    %p141 = scmp.ne.s32.totalorder %s132, %s133
    %p142 = scmp.eq.s32.totalorder %s17, 0
    %p143 = por %p141, %p142
    %p144 = scmp.ne.s32.totalorder %s132, %s133
    %p145 = scmp.eq.s32.totalorder %s18, 1
    %p146 = por %p144, %p145
    %p148 = scmp.ne.s32.totalorder %s133, %s147
    %p149 = scmp.eq.s32.totalorder %s18, 0
    %p150 = por %p148, %p149
    %s151 = ssub.s32 %s12, %s19
    %p152 = scmp.eq.s32.totalorder %s151, 0
    %s154 = sadd.s32 %s153, 1
    %s155 = scalar_select %p152, %s153, %s154
    %p158 = pneg %p152
    %p159 = scmp.eq.s32.totalorder %s12, 1
    %p160 = por %p158, %p159
    %p161 = scmp.ne.s32.totalorder %s153, %s156
    %p162 = scmp.eq.s32.totalorder %s12, 0
    %p163 = por %p161, %p162
    %p164 = scmp.ne.s32.totalorder %s153, %s156
    %p165 = scmp.eq.s32.totalorder %s17, 1
    %p166 = por %p164, %p165
    %p167 = scmp.ne.s32.totalorder %s156, %s157
    %p168 = scmp.eq.s32.totalorder %s17, 0
    %p169 = por %p167, %p168
    %p170 = scmp.ne.s32.totalorder %s156, %s157
    %p171 = scmp.eq.s32.totalorder %s18, 1
    %p172 = por %p170, %p171
    %p174 = scmp.ne.s32.totalorder %s157, %s173
    %p175 = scmp.eq.s32.totalorder %s18, 0
    %p176 = por %p174, %p175
    %p177 = scmp.le.s32.totalorder 1, %s12
    %p178 = scmp.lt.s32.totalorder %s12, 3
    %p179 = pnand %p177, %p178
    %p180 = pneg %p179
    // Predicated region
    $region9: #{down_shifted_conv2d.1} parent=5 // pred_check
      _
    $region10: #{down_shifted_conv2d.1} parent=5 // pred_check_branch
      %182 = sbr.rel (%p179) target = $region12
    $region11: #{down_shifted_conv2d.1} parent=5 // pred_region
      %s183 = ssub.s32 %s12, 1
      // Predicated region
      $region13: #{down_shifted_conv2d.1} parent=11 // pred_check
        %p184 = pneg %p59
      $region14: #{down_shifted_conv2d.1} parent=11 // pred_check_branch
        %186 = sbr.rel (%p184) target = $region16
      $region15: #{down_shifted_conv2d.1} parent=11 // pred_region
        _
      $region16: #{down_shifted_conv2d.1} parent=11 // pred_fallthru
        _
      // Predicated region
      $region17: #{down_shifted_conv2d.1} parent=11 // pred_check
        %p187 = pneg %p80
      $region18: #{down_shifted_conv2d.1} parent=11 // pred_check_branch
        %189 = sbr.rel (%p187) target = $region20
      $region19: #{down_shifted_conv2d.1} parent=11 // pred_region
        _
      $region20: #{down_shifted_conv2d.1} parent=11 // pred_fallthru
        _
      // Predicated region
      $region21: #{down_shifted_conv2d.1} parent=11 // pred_check
        %p190 = pneg %p101
      $region22: #{down_shifted_conv2d.1} parent=11 // pred_check_branch
        %192 = sbr.rel (%p190) target = $region24
      $region23: #{down_shifted_conv2d.1} parent=11 // pred_region
        _
      $region24: #{down_shifted_conv2d.1} parent=11 // pred_fallthru
        _
      // Predicated region
      $region25: #{down_shifted_conv2d.1} parent=11 // pred_check
        %p193 = pneg %p122
      $region26: #{down_shifted_conv2d.1} parent=11 // pred_check_branch
        %195 = sbr.rel (%p193) target = $region28
      $region27: #{down_shifted_conv2d.1} parent=11 // pred_region
        _
      $region28: #{down_shifted_conv2d.1} parent=11 // pred_fallthru
        _
      // Predicated region
      $region29: #{down_shifted_conv2d.1} parent=11 // pred_check
        %p196 = pneg %p143
      $region30: #{down_shifted_conv2d.1} parent=11 // pred_check_branch
        %198 = sbr.rel (%p196) target = $region32
      $region31: #{down_shifted_conv2d.1} parent=11 // pred_region
        _
      $region32: #{down_shifted_conv2d.1} parent=11 // pred_fallthru
        _
    $region12: #{down_shifted_conv2d.1} parent=5 // pred_fallthru
      _
    %p199 = scmp.lt.s32.totalorder %s12, 2
    // Predicated region
    $region33: #{down_shifted_conv2d.1} parent=5 // pred_check
      %p200 = pneg %p199
    $region34: #{down_shifted_conv2d.1} parent=5 // pred_check_branch
      %202 = sbr.rel (%p200) target = $region36
    $region35: #{down_shifted_conv2d.1} parent=5 // pred_region
      // Predicated region
      $region37: #{down_shifted_conv2d.1} parent=35 // pred_check
        %p203 = pneg %p32
      $region38: #{down_shifted_conv2d.1} parent=35 // pred_check_branch
        %205 = sbr.rel (%p203) target = $region40
      $region39: #{down_shifted_conv2d.1} parent=35 // pred_region
        %p206 = scmp.lt.s32.totalorder %s12, 1
        %s207 = scalar_select %p206, %s12, 1
        %s208 = smul.addr %s207, 3
        %s209 = smul.addr %s208, 2
        %s210 = scalar_lea.vmem %s0, %s209
      $region40: #{down_shifted_conv2d.1} parent=35 // pred_fallthru
        _
    $region36: #{down_shifted_conv2d.1} parent=5 // pred_fallthru
      _
    %p211 = scmp.le.s32.totalorder 1, %s12
    %p212 = scmp.lt.s32.totalorder %s12, 3
    %p213 = pnand %p211, %p212
    %p214 = pneg %p213
    // Predicated region
    $region41: #{down_shifted_conv2d.1} parent=5 // pred_check
      _
    $region42: #{down_shifted_conv2d.1} parent=5 // pred_check_branch
      %216 = sbr.rel (%p213) target = $region44
    $region43: #{down_shifted_conv2d.1} parent=5 // pred_region
      %s217 = ssub.s32 %s12, 1
      %p218 = scmp.lt.s32.totalorder %s17, 1
      %s219 = scalar_select %p218, %s17, 1
      %s220 = smul.addr %s219, 3
      %s221 = smul.addr %s220, 2
      %s222 = scalar_lea.vmem %s0, %s221
      %p223 = pneg %p38
      %p224 = pneg %p35
      %p225 = pneg %p59
      %p226 = pneg %p56
      %p227 = pneg %p80
      %p228 = pneg %p77
      %p229 = pneg %p101
      %p230 = pneg %p98
      %p231 = pneg %p122
      %p232 = pneg %p119
      %p233 = pneg %p143
      %p234 = pneg %p140
      %p235 = pneg %p169
      %p236 = pneg %p166
      %p237 = scmp.lt.s32.totalorder %s17, 1
      %s238 = scalar_select %p237, %s17, 1
      %s239 = smul.addr %s238, 8
      %s240 = smul.addr %s239, 4
      %s241 = scalar_lea.vmem %s6, %s240
      %p242 = scmp.lt.s32.totalorder %s17, 1
      %s243 = scalar_select %p242, %s17, 1
      %s244 = smul.addr %s243, 3
      %s245 = smul.addr %s244, 2
      %s246 = scalar_lea.vmem %s0, %s245
      %p247 = scmp.lt.s32.totalorder %s17, 1
      %s248 = scalar_select %p247, %s17, 1
      %s249 = smul.addr %s248, 8
      %s250 = smul.addr %s249, 4
      %s251 = scalar_lea.vmem %s6, %s250
      %v253 = vld [vmem:[%s2] sm:$0xff]
      %v254 = vld [vmem:[%s2 + $0x8] sm:$0xff]
      %v255 = vld [vmem:[%s2 + $0x10] sm:$0xff]
      %v256 = vld [vmem:[%s2 + $0x18] sm:$0xff]
      %v257 = vld [vmem:[%s3] sm:$0xff]
      %v258 = vld [vmem:[%s3 + $0x8] sm:$0xff]
      %v259 = vld [vmem:[%s3 + $0x10] sm:$0xff]
      %v260 = vld [vmem:[%s3 + $0x18] sm:$0xff]
      %v261 = vld [vmem:[%s4] sm:$0xff]
      %v262 = vld [vmem:[%s4 + $0x8] sm:$0xff]
      %v263 = vld [vmem:[%s4 + $0x10] sm:$0xff]
      %v264 = vld [vmem:[%s4 + $0x18] sm:$0xff]
      %v265 = vld [vmem:[%s5] sm:$0xff]
      %v266 = vld [vmem:[%s5 + $0x8] sm:$0xff]
      %v267 = vld [vmem:[%s5 + $0x10] sm:$0xff]
      %v268 = vld [vmem:[%s5 + $0x18] sm:$0xff]
      %v269 = vld [vmem:[%s246] sm:$0x3f]
      %v270 = vld [vmem:[%s1] sm:$0xf]
      %v271 = vld [vmem:[%s1 + $0x4] sm:$0xf]
      %v272 = vld [vmem:[%s1 + $0x8] sm:$0xf]
      %v273 = vld [vmem:[%s1 + $0xc] sm:$0xf]
      %s274 = scalar_lea.vmem %s1, 16
      %v275 = vld [vmem:[%s274] sm:$0xf]
      %v276 = vld [vmem:[%s274 + $0x4] sm:$0xf]
      %v277 = vld [vmem:[%s274 + $0x8] sm:$0xf]
      %v278 = vld [vmem:[%s274 + $0xc] sm:$0xf]
      %v283 = vunpack.c.l.b16 %v275
      %v284 = vunpack.c.l.b16 %v276
      %v285 = vunpack.c.l.b16 %v277
      %v286 = vunpack.c.l.b16 %v278
      %v287 = vpack.c.b16 %v284, %v283
      %v288 = vpack.c.b16 %v286, %v285
      %v290 = vcombine.high %v269, %v269
      %v292 = vunpack.c.l.s4 1983009808
      %v293 = vunpack.c.0.s8 %v292
      %v294 = vlaneseq
      %v295 = vshrl.u32 %v294, 7
      %v296 = vsub.s32 %v293, %v295
      %v297 = vrot.slane %v269, %v296
      %v299 = vunpack.c.l.s4 1983009808
      %v300 = vunpack.c.0.s8 %v299
      %v301 = vlaneseq
      %v302 = vshrl.u32 %v301, 7
      %v303 = vsub.s32 %v300, %v302
      %v304 = vrot.slane %v290, %v303
      %v305 = vcombine.high %v297, %v297
      %306 = vrot.lane.b32.xlu0 %v297, 127
      %v307 = vpop.permute.xlu0 %306
      %308 = vrot.lane.b32.xlu0 %v305, 127
      %v309 = vpop.permute.xlu0 %308
      %310 = vrot.lane.b32.xlu0 %v304, 127
      %v311 = vpop.permute.xlu0 %310
      %vm312 = vcmask 1039360
      %v313 = vsel %vm312, %v307, %v309
      %v314 = vsel %vm312, %v309, %v311
      %vm315 = vcmask 31744
      %v317 = vsel %vm315, %v287, 0
      %v320 = vsel %vm315, %v288, 0
      %vm322 = vcmask 1041408
      %v324 = vsel %vm322, %v313, 0
      %v327 = vsel %vm322, %v314, 0
      %v330 = vsel %vm322, %v311, 0
      %332 = vmatprep.subr.bf16.mxu0 %v327
      %333 = vmatpush1.bf16.msra.mxu0 %v324
      %334 = vmatprep.subr.bf16.mxu0 0
      %335 = vmatpush1.bf16.msra.mxu0 0
      %336 = vmatprep.subr.bf16.mxu0 0
      %337 = vmatpush1.bf16.msra.mxu0 0
      %338 = vmatprep.subr.bf16.mxu0 0
      %339 = vmatpush1.bf16.msra.mxu0 0
      %340 = vmatprep.subr.bf16.mxu0 0
      %341 = vmatpush1.bf16.msra.mxu0 0
      %342 = vmatprep.subr.bf16.mxu0 0
      %343 = vmatpush1.bf16.msra.mxu0 0
      %344 = vmatprep.subr.bf16.mxu0 0
      %345 = vmatpush1.bf16.msra.mxu0 0
      %346 = vmatprep.subr.bf16.mxu0 0
      %347 = vmatpush1.bf16.msra.mxu0 0
      %348 = vmatprep.subr.bf16.mxu0 0
      %349 = vmatpush1.bf16.msra.mxu0 0
      %350 = vmatprep.subr.bf16.mxu0 0
      %351 = vmatpush1.bf16.msra.mxu0 0
      %352 = vmatprep.subr.bf16.mxu0 0
      %353 = vmatpush1.bf16.msra.mxu0 0
      %354 = vmatprep.subr.bf16.mxu0 0
      %355 = vmatpush1.bf16.msra.mxu0 0
      %356 = vmatprep.subr.bf16.mxu0 0
      %357 = vmatpush1.bf16.msra.mxu0 0
      %358 = vmatprep.subr.bf16.mxu0 0
      %359 = vmatpush1.bf16.msra.mxu0 0
      %360 = vmatprep.subr.bf16.mxu0 0
      %361 = vmatpush1.bf16.msra.mxu0 0
      %362 = vmatprep.subr.bf16.mxu0 0
      %363 = vmatpush1.bf16.msra.mxu0 0
      %364 = vmatprep.mubr.bf16.mxu0 0
      %365 = vmatmul.mubr.bf16.gmra.mrb[0].mxu0 %v317
      %v366 = vpop.f32.mrb[0].mxu0
      %v367 = vadd.f32 0.0, %v366
      %v368 = vpop.f32.mrb[0].mxu0
      %v369 = vadd.f32 0.0, %v368
      %v370 = vpop.f32.mrb[0].mxu0
      %v371 = vadd.f32 0.0, %v370
      %v372 = vpop.f32.mrb[0].mxu0
      %v373 = vadd.f32 0.0, %v372
      %374 = vmatprep.mubr.bf16.mxu0 0
      %375 = vmatmul.mubr.bf16.gmra.mrb[0].mxu0 %v320
      %v376 = vpop.f32.mrb[0].mxu0
      %v377 = vadd.f32 0.0, %v376
      %v378 = vpop.f32.mrb[0].mxu0
      %v379 = vadd.f32 0.0, %v378
      %v380 = vpop.f32.mrb[0].mxu0
      %v381 = vadd.f32 0.0, %v380
      %v382 = vpop.f32.mrb[0].mxu0
      %v383 = vadd.f32 0.0, %v382
      %384 = vdwg.mxu0
      %385 = vmatprep.subr.bf16.mxu0 0
      %386 = vmatpush1.bf16.msra.mxu0 %v330
      %387 = vmatprep.subr.bf16.mxu0 0
      %388 = vmatpush1.bf16.msra.mxu0 0
      %389 = vmatprep.subr.bf16.mxu0 0
      %390 = vmatpush1.bf16.msra.mxu0 0
      %391 = vmatprep.subr.bf16.mxu0 0
      %392 = vmatpush1.bf16.msra.mxu0 0
      %393 = vmatprep.subr.bf16.mxu0 0
      %394 = vmatpush1.bf16.msra.mxu0 0
      %395 = vmatprep.subr.bf16.mxu0 0
      %396 = vmatpush1.bf16.msra.mxu0 0
      %397 = vmatprep.subr.bf16.mxu0 0
      %398 = vmatpush1.bf16.msra.mxu0 0
      %399 = vmatprep.subr.bf16.mxu0 0
      %400 = vmatpush1.bf16.msra.mxu0 0
      %401 = vmatprep.subr.bf16.mxu0 0
      %402 = vmatpush1.bf16.msra.mxu0 0
      %403 = vmatprep.subr.bf16.mxu0 0
      %404 = vmatpush1.bf16.msra.mxu0 0
      %405 = vmatprep.subr.bf16.mxu0 0
      %406 = vmatpush1.bf16.msra.mxu0 0
      %407 = vmatprep.subr.bf16.mxu0 0
      %408 = vmatpush1.bf16.msra.mxu0 0
      %409 = vmatprep.subr.bf16.mxu0 0
      %410 = vmatpush1.bf16.msra.mxu0 0
      %411 = vmatprep.subr.bf16.mxu0 0
      %412 = vmatpush1.bf16.msra.mxu0 0
      %413 = vmatprep.subr.bf16.mxu0 0
      %414 = vmatpush1.bf16.msra.mxu0 0
      %415 = vmatprep.subr.bf16.mxu0 0
      %416 = vmatpush1.bf16.msra.mxu0 0
      %417 = vmatprep.mubr.bf16.mxu0 0
      %418 = vmatmul.mubr.bf16.gmra.mrb[0].mxu0 %v317
      %v419 = vpop.f32.mrb[0].mxu0
      %v420 = vadd.f32 0.0, %v419
      %v421 = vpop.f32.mrb[0].mxu0
      %v422 = vpop.f32.mrb[0].mxu0
      %v423 = vadd.f32 0.0, %v422
      %v424 = vpop.f32.mrb[0].mxu0
      %425 = vmatprep.mubr.bf16.mxu0 0
      %426 = vmatmul.mubr.bf16.gmra.mrb[0].mxu0 %v320
      %v427 = vpop.f32.mrb[0].mxu0
      %v428 = vadd.f32 0.0, %v427
      %v429 = vpop.f32.mrb[0].mxu0
      %v430 = vpop.f32.mrb[0].mxu0
      %v431 = vadd.f32 0.0, %v430
      %v432 = vpop.f32.mrb[0].mxu0
      %433 = vdwg.mxu0
      %v438 = vunpack.c.l.b16 %v270
      %v439 = vunpack.c.l.b16 %v271
      %v440 = vunpack.c.l.b16 %v272
      %v441 = vunpack.c.l.b16 %v273
      %v442 = vpack.c.b16 %v439, %v438
      %v443 = vpack.c.b16 %v441, %v440
      %v445 = vsel %vm315, %v442, 0
      %v448 = vsel %vm315, %v443, 0
      %v451 = vsel %vm322, %v297, 0
      %v454 = vsel %vm322, %v305, 0
      %v457 = vsel %vm322, %v304, 0
      %459 = vmatprep.subr.bf16.mxu0 %v454
      %460 = vmatpush1.bf16.msra.mxu0 %v451
      %461 = vmatprep.subr.bf16.mxu0 0
      %462 = vmatpush1.bf16.msra.mxu0 0
      %463 = vmatprep.subr.bf16.mxu0 0
      %464 = vmatpush1.bf16.msra.mxu0 0
      %465 = vmatprep.subr.bf16.mxu0 0
      %466 = vmatpush1.bf16.msra.mxu0 0
      %467 = vmatprep.subr.bf16.mxu0 0
      %468 = vmatpush1.bf16.msra.mxu0 0
      %469 = vmatprep.subr.bf16.mxu0 0
      %470 = vmatpush1.bf16.msra.mxu0 0
      %471 = vmatprep.subr.bf16.mxu0 0
      %472 = vmatpush1.bf16.msra.mxu0 0
      %473 = vmatprep.subr.bf16.mxu0 0
      %474 = vmatpush1.bf16.msra.mxu0 0
      %475 = vmatprep.subr.bf16.mxu0 0
      %476 = vmatpush1.bf16.msra.mxu0 0
      %477 = vmatprep.subr.bf16.mxu0 0
      %478 = vmatpush1.bf16.msra.mxu0 0
      %479 = vmatprep.subr.bf16.mxu0 0
      %480 = vmatpush1.bf16.msra.mxu0 0
      %481 = vmatprep.subr.bf16.mxu0 0
      %482 = vmatpush1.bf16.msra.mxu0 0
      %483 = vmatprep.subr.bf16.mxu0 0
      %484 = vmatpush1.bf16.msra.mxu0 0
      %485 = vmatprep.subr.bf16.mxu0 0
      %486 = vmatpush1.bf16.msra.mxu0 0
      %487 = vmatprep.subr.bf16.mxu0 0
      %488 = vmatpush1.bf16.msra.mxu0 0
      %489 = vmatprep.subr.bf16.mxu0 0
      %490 = vmatpush1.bf16.msra.mxu0 0
      %491 = vmatprep.mubr.bf16.mxu0 0
      %492 = vmatmul.mubr.bf16.gmra.mrb[0].mxu0 %v445
      %v493 = vpop.f32.mrb[0].mxu0
      %v494 = vadd.f32 %v367, %v493
      %v495 = vpop.f32.mrb[0].mxu0
      %v496 = vadd.f32 %v369, %v495
      %v497 = vpop.f32.mrb[0].mxu0
      %v498 = vadd.f32 %v371, %v497
      %v499 = vpop.f32.mrb[0].mxu0
      %v500 = vadd.f32 %v373, %v499
      %501 = vmatprep.mubr.bf16.mxu0 0
      %502 = vmatmul.mubr.bf16.gmra.mrb[0].mxu0 %v448
      %v503 = vpop.f32.mrb[0].mxu0
      %v504 = vadd.f32 %v377, %v503
      %v505 = vpop.f32.mrb[0].mxu0
      %v506 = vadd.f32 %v379, %v505
      %v507 = vpop.f32.mrb[0].mxu0
      %v508 = vadd.f32 %v381, %v507
      %v509 = vpop.f32.mrb[0].mxu0
      %v510 = vadd.f32 %v383, %v509
      %511 = vdwg.mxu0
      %512 = vmatprep.subr.bf16.mxu0 0
      %513 = vmatpush1.bf16.msra.mxu0 %v457
      %514 = vmatprep.subr.bf16.mxu0 0
      %515 = vmatpush1.bf16.msra.mxu0 0
      %516 = vmatprep.subr.bf16.mxu0 0
      %517 = vmatpush1.bf16.msra.mxu0 0
      %518 = vmatprep.subr.bf16.mxu0 0
      %519 = vmatpush1.bf16.msra.mxu0 0
      %520 = vmatprep.subr.bf16.mxu0 0
      %521 = vmatpush1.bf16.msra.mxu0 0
      %522 = vmatprep.subr.bf16.mxu0 0
      %523 = vmatpush1.bf16.msra.mxu0 0
      %524 = vmatprep.subr.bf16.mxu0 0
      %525 = vmatpush1.bf16.msra.mxu0 0
      %526 = vmatprep.subr.bf16.mxu0 0
      %527 = vmatpush1.bf16.msra.mxu0 0
      %528 = vmatprep.subr.bf16.mxu0 0
      %529 = vmatpush1.bf16.msra.mxu0 0
      %530 = vmatprep.subr.bf16.mxu0 0
      %531 = vmatpush1.bf16.msra.mxu0 0
      %532 = vmatprep.subr.bf16.mxu0 0
      %533 = vmatpush1.bf16.msra.mxu0 0
      %534 = vmatprep.subr.bf16.mxu0 0
      %535 = vmatpush1.bf16.msra.mxu0 0
      %536 = vmatprep.subr.bf16.mxu0 0
      %537 = vmatpush1.bf16.msra.mxu0 0
      %538 = vmatprep.subr.bf16.mxu0 0
      %539 = vmatpush1.bf16.msra.mxu0 0
      %540 = vmatprep.subr.bf16.mxu0 0
      %541 = vmatpush1.bf16.msra.mxu0 0
      %542 = vmatprep.subr.bf16.mxu0 0
      %543 = vmatpush1.bf16.msra.mxu0 0
      %544 = vmatprep.mubr.bf16.mxu0 0
      %545 = vmatmul.mubr.bf16.gmra.mrb[0].mxu0 %v445
      %v546 = vpop.f32.mrb[0].mxu0
      %v547 = vadd.f32 %v420, %v546
      %v548 = vpop.f32.mrb[0].mxu0
      %v549 = vpop.f32.mrb[0].mxu0
      %v550 = vadd.f32 %v423, %v549
      %v551 = vpop.f32.mrb[0].mxu0
      %552 = vmatprep.mubr.bf16.mxu0 0
      %553 = vmatmul.mubr.bf16.gmra.mrb[0].mxu0 %v448
      %v554 = vpop.f32.mrb[0].mxu0
      %v555 = vadd.f32 %v428, %v554
      %v556 = vpop.f32.mrb[0].mxu0
      %v557 = vpop.f32.mrb[0].mxu0
      %v558 = vadd.f32 %v431, %v557
      %v559 = vpop.f32.mrb[0].mxu0
      %560 = vdwg.mxu0
      %s561 = scalar_lea.vmem %s1, 32
      %v562 = vld [vmem:[%s561] sm:$0xf]
      %v563 = vld [vmem:[%s561 + $0x4] sm:$0xf]
      %v564 = vld [vmem:[%s561 + $0x8] sm:$0xf]
      %v565 = vld [vmem:[%s561 + $0xc] sm:$0xf]
      %v570 = vunpack.c.l.b16 %v562
      %v571 = vunpack.c.l.b16 %v563
      %v572 = vunpack.c.l.b16 %v564
      %v573 = vunpack.c.l.b16 %v565
      %v574 = vpack.c.b16 %v571, %v570
      %v575 = vpack.c.b16 %v573, %v572
      %576 = vrot.lane.b32.xlu0 %v297, 126
      %v577 = vpop.permute.xlu0 %576
      %578 = vrot.lane.b32.xlu0 %v305, 126
      %v579 = vpop.permute.xlu0 %578
      %580 = vrot.lane.b32.xlu0 %v304, 126
      %v581 = vpop.permute.xlu0 %580
      %vm582 = vcmask 1031168
      %v583 = vsel %vm582, %v577, %v579
      %v584 = vsel %vm582, %v579, %v581
      %v586 = vsel %vm315, %v574, 0
      %v589 = vsel %vm315, %v575, 0
      %v592 = vsel %vm322, %v583, 0
      %v595 = vsel %vm322, %v584, 0
      %v598 = vsel %vm322, %v581, 0
      %600 = vmatprep.subr.bf16.mxu0 %v595
      %601 = vmatpush1.bf16.msra.mxu0 %v592
      %602 = vmatprep.subr.bf16.mxu0 0
      %603 = vmatpush1.bf16.msra.mxu0 0
      %604 = vmatprep.subr.bf16.mxu0 0
      %605 = vmatpush1.bf16.msra.mxu0 0
      %606 = vmatprep.subr.bf16.mxu0 0
      %607 = vmatpush1.bf16.msra.mxu0 0
      %608 = vmatprep.subr.bf16.mxu0 0
      %609 = vmatpush1.bf16.msra.mxu0 0
      %610 = vmatprep.subr.bf16.mxu0 0
      %611 = vmatpush1.bf16.msra.mxu0 0
      %612 = vmatprep.subr.bf16.mxu0 0
      %613 = vmatpush1.bf16.msra.mxu0 0
      %614 = vmatprep.subr.bf16.mxu0 0
      %615 = vmatpush1.bf16.msra.mxu0 0
      %616 = vmatprep.subr.bf16.mxu0 0
      %617 = vmatpush1.bf16.msra.mxu0 0
      %618 = vmatprep.subr.bf16.mxu0 0
      %619 = vmatpush1.bf16.msra.mxu0 0
      %620 = vmatprep.subr.bf16.mxu0 0
      %621 = vmatpush1.bf16.msra.mxu0 0
      %622 = vmatprep.subr.bf16.mxu0 0
      %623 = vmatpush1.bf16.msra.mxu0 0
      %624 = vmatprep.subr.bf16.mxu0 0
      %625 = vmatpush1.bf16.msra.mxu0 0
      %626 = vmatprep.subr.bf16.mxu0 0
      %627 = vmatpush1.bf16.msra.mxu0 0
      %628 = vmatprep.subr.bf16.mxu0 0
      %629 = vmatpush1.bf16.msra.mxu0 0
      %630 = vmatprep.subr.bf16.mxu0 0
      %631 = vmatpush1.bf16.msra.mxu0 0
      %632 = vmatprep.mubr.bf16.mxu0 0
      %633 = vmatmul.mubr.bf16.gmra.mrb[0].mxu0 %v586
      %v634 = vpop.f32.mrb[0].mxu0
      %v635 = vadd.f32 0.0, %v634
      %v636 = vpop.f32.mrb[0].mxu0
      %v637 = vadd.f32 0.0, %v636
      %v638 = vpop.f32.mrb[0].mxu0
      %v639 = vadd.f32 0.0, %v638
      %v640 = vpop.f32.mrb[0].mxu0
      %v641 = vadd.f32 0.0, %v640
      %642 = vmatprep.mubr.bf16.mxu0 0
      %643 = vmatmul.mubr.bf16.gmra.mrb[0].mxu0 %v589
      %v644 = vpop.f32.mrb[0].mxu0
      %v645 = vadd.f32 0.0, %v644
      %v646 = vpop.f32.mrb[0].mxu0
      %v647 = vadd.f32 0.0, %v646
      %v648 = vpop.f32.mrb[0].mxu0
      %v649 = vadd.f32 0.0, %v648
      %v650 = vpop.f32.mrb[0].mxu0
      %v651 = vadd.f32 0.0, %v650
      %652 = vdwg.mxu0
      %653 = vmatprep.subr.bf16.mxu0 0
      %654 = vmatpush1.bf16.msra.mxu0 %v598
      %655 = vmatprep.subr.bf16.mxu0 0
      %656 = vmatpush1.bf16.msra.mxu0 0
      %657 = vmatprep.subr.bf16.mxu0 0
      %658 = vmatpush1.bf16.msra.mxu0 0
      %659 = vmatprep.subr.bf16.mxu0 0
      %660 = vmatpush1.bf16.msra.mxu0 0
      %661 = vmatprep.subr.bf16.mxu0 0
      %662 = vmatpush1.bf16.msra.mxu0 0
      %663 = vmatprep.subr.bf16.mxu0 0
      %664 = vmatpush1.bf16.msra.mxu0 0
      %665 = vmatprep.subr.bf16.mxu0 0
      %666 = vmatpush1.bf16.msra.mxu0 0
      %667 = vmatprep.subr.bf16.mxu0 0
      %668 = vmatpush1.bf16.msra.mxu0 0
      %669 = vmatprep.subr.bf16.mxu0 0
      %670 = vmatpush1.bf16.msra.mxu0 0
      %671 = vmatprep.subr.bf16.mxu0 0
      %672 = vmatpush1.bf16.msra.mxu0 0
      %673 = vmatprep.subr.bf16.mxu0 0
      %674 = vmatpush1.bf16.msra.mxu0 0
      %675 = vmatprep.subr.bf16.mxu0 0
      %676 = vmatpush1.bf16.msra.mxu0 0
      %677 = vmatprep.subr.bf16.mxu0 0
      %678 = vmatpush1.bf16.msra.mxu0 0
      %679 = vmatprep.subr.bf16.mxu0 0
      %680 = vmatpush1.bf16.msra.mxu0 0
      %681 = vmatprep.subr.bf16.mxu0 0
      %682 = vmatpush1.bf16.msra.mxu0 0
      %683 = vmatprep.subr.bf16.mxu0 0
      %684 = vmatpush1.bf16.msra.mxu0 0
      %685 = vmatprep.mubr.bf16.mxu0 0
      %686 = vmatmul.mubr.bf16.gmra.mrb[0].mxu0 %v586
      %v687 = vpop.f32.mrb[0].mxu0
      %v688 = vadd.f32 0.0, %v687
      %v689 = vpop.f32.mrb[0].mxu0
      %v690 = vpop.f32.mrb[0].mxu0
      %v691 = vadd.f32 0.0, %v690
      %v692 = vpop.f32.mrb[0].mxu0
      %693 = vmatprep.mubr.bf16.mxu0 0
      %694 = vmatmul.mubr.bf16.gmra.mrb[0].mxu0 %v589
      %v695 = vpop.f32.mrb[0].mxu0
      %v696 = vadd.f32 0.0, %v695
      %v697 = vpop.f32.mrb[0].mxu0
      %v698 = vpop.f32.mrb[0].mxu0
      %v699 = vadd.f32 0.0, %v698
      %v700 = vpop.f32.mrb[0].mxu0
      %701 = vdwg.mxu0
      %v702 = vadd.f32 %v494, %v635
      %v703 = vadd.f32 %v496, %v637
      %v704 = vadd.f32 %v547, %v688
      %v705 = vadd.f32 %v498, %v639
      %v706 = vadd.f32 %v500, %v641
      %v707 = vadd.f32 %v550, %v691
      %v708 = vadd.f32 %v504, %v645
      %v709 = vadd.f32 %v506, %v647
      %v710 = vadd.f32 %v555, %v696
      %v711 = vadd.f32 %v508, %v649
      %v712 = vadd.f32 %v510, %v651
      %v713 = vadd.f32 %v558, %v699
      %s714 = scalar_lea.vmem %s1, 48
      %v715 = vld [vmem:[%s714] sm:$0xf]
      %v716 = vld [vmem:[%s714 + $0x4] sm:$0xf]
      %v717 = vld [vmem:[%s714 + $0x8] sm:$0xf]
      %v718 = vld [vmem:[%s714 + $0xc] sm:$0xf]
      %v723 = vunpack.c.l.b16 %v715
      %v724 = vunpack.c.l.b16 %v716
      %v725 = vunpack.c.l.b16 %v717
      %v726 = vunpack.c.l.b16 %v718
      %v727 = vpack.c.b16 %v724, %v723
      %v728 = vpack.c.b16 %v726, %v725
      %729 = vrot.lane.b32.xlu0 %v297, 110
      %v730 = vpop.permute.xlu0 %729
      %731 = vrot.lane.b32.xlu0 %v305, 110
      %v732 = vpop.permute.xlu0 %731
      %733 = vrot.lane.b32.xlu0 %v304, 110
      %v734 = vpop.permute.xlu0 %733
      %vm735 = vcmask 900096
      %v736 = vsel %vm735, %v730, %v732
      %v737 = vsel %vm735, %v732, %v734
      %v739 = vsel %vm315, %v727, 0
      %v742 = vsel %vm315, %v728, 0
      %v745 = vsel %vm322, %v736, 0
      %v748 = vsel %vm322, %v737, 0
      %v751 = vsel %vm322, %v734, 0
      %753 = vmatprep.subr.bf16.mxu0 %v748
      %754 = vmatpush1.bf16.msra.mxu0 %v745
      %755 = vmatprep.subr.bf16.mxu0 0
      %756 = vmatpush1.bf16.msra.mxu0 0
      %757 = vmatprep.subr.bf16.mxu0 0
      %758 = vmatpush1.bf16.msra.mxu0 0
      %759 = vmatprep.subr.bf16.mxu0 0
      %760 = vmatpush1.bf16.msra.mxu0 0
      %761 = vmatprep.subr.bf16.mxu0 0
      %762 = vmatpush1.bf16.msra.mxu0 0
      %763 = vmatprep.subr.bf16.mxu0 0
      %764 = vmatpush1.bf16.msra.mxu0 0
      %765 = vmatprep.subr.bf16.mxu0 0
      %766 = vmatpush1.bf16.msra.mxu0 0
      %767 = vmatprep.subr.bf16.mxu0 0
      %768 = vmatpush1.bf16.msra.mxu0 0
      %769 = vmatprep.subr.bf16.mxu0 0
      %770 = vmatpush1.bf16.msra.mxu0 0
      %771 = vmatprep.subr.bf16.mxu0 0
      %772 = vmatpush1.bf16.msra.mxu0 0
      %773 = vmatprep.subr.bf16.mxu0 0
      %774 = vmatpush1.bf16.msra.mxu0 0
      %775 = vmatprep.subr.bf16.mxu0 0
      %776 = vmatpush1.bf16.msra.mxu0 0
      %777 = vmatprep.subr.bf16.mxu0 0
      %778 = vmatpush1.bf16.msra.mxu0 0
      %779 = vmatprep.subr.bf16.mxu0 0
      %780 = vmatpush1.bf16.msra.mxu0 0
      %781 = vmatprep.subr.bf16.mxu0 0
      %782 = vmatpush1.bf16.msra.mxu0 0
      %783 = vmatprep.subr.bf16.mxu0 0
      %784 = vmatpush1.bf16.msra.mxu0 0
      %785 = vmatprep.mubr.bf16.mxu0 0
      %786 = vmatmul.mubr.bf16.gmra.mrb[0].mxu0 %v739
      %v787 = vpop.f32.mrb[0].mxu0
      %v788 = vadd.f32 0.0, %v787
      %v789 = vpop.f32.mrb[0].mxu0
      %v790 = vadd.f32 0.0, %v789
      %v791 = vpop.f32.mrb[0].mxu0
      %v792 = vadd.f32 0.0, %v791
      %v793 = vpop.f32.mrb[0].mxu0
      %v794 = vadd.f32 0.0, %v793
      %795 = vmatprep.mubr.bf16.mxu0 0
      %796 = vmatmul.mubr.bf16.gmra.mrb[0].mxu0 %v742
      %v797 = vpop.f32.mrb[0].mxu0
      %v798 = vadd.f32 0.0, %v797
      %v799 = vpop.f32.mrb[0].mxu0
      %v800 = vadd.f32 0.0, %v799
      %v801 = vpop.f32.mrb[0].mxu0
      %v802 = vadd.f32 0.0, %v801
      %v803 = vpop.f32.mrb[0].mxu0
      %v804 = vadd.f32 0.0, %v803
      %805 = vdwg.mxu0
      %806 = vmatprep.subr.bf16.mxu0 0
      %807 = vmatpush1.bf16.msra.mxu0 %v751
      %808 = vmatprep.subr.bf16.mxu0 0
      %809 = vmatpush1.bf16.msra.mxu0 0
      %810 = vmatprep.subr.bf16.mxu0 0
      %811 = vmatpush1.bf16.msra.mxu0 0
      %812 = vmatprep.subr.bf16.mxu0 0
      %813 = vmatpush1.bf16.msra.mxu0 0
      %814 = vmatprep.subr.bf16.mxu0 0
      %815 = vmatpush1.bf16.msra.mxu0 0
      %816 = vmatprep.subr.bf16.mxu0 0
      %817 = vmatpush1.bf16.msra.mxu0 0
      %818 = vmatprep.subr.bf16.mxu0 0
      %819 = vmatpush1.bf16.msra.mxu0 0
      %820 = vmatprep.subr.bf16.mxu0 0
      %821 = vmatpush1.bf16.msra.mxu0 0
      %822 = vmatprep.subr.bf16.mxu0 0
      %823 = vmatpush1.bf16.msra.mxu0 0
      %824 = vmatprep.subr.bf16.mxu0 0
      %825 = vmatpush1.bf16.msra.mxu0 0
      %826 = vmatprep.subr.bf16.mxu0 0
      %827 = vmatpush1.bf16.msra.mxu0 0
      %828 = vmatprep.subr.bf16.mxu0 0
      %829 = vmatpush1.bf16.msra.mxu0 0
      %830 = vmatprep.subr.bf16.mxu0 0
      %831 = vmatpush1.bf16.msra.mxu0 0
      %832 = vmatprep.subr.bf16.mxu0 0
      %833 = vmatpush1.bf16.msra.mxu0 0
      %834 = vmatprep.subr.bf16.mxu0 0
      %835 = vmatpush1.bf16.msra.mxu0 0
      %836 = vmatprep.subr.bf16.mxu0 0
      %837 = vmatpush1.bf16.msra.mxu0 0
      %838 = vmatprep.mubr.bf16.mxu0 0
      %839 = vmatmul.mubr.bf16.gmra.mrb[0].mxu0 %v739
      %v840 = vpop.f32.mrb[0].mxu0
      %v841 = vadd.f32 0.0, %v840
      %v842 = vpop.f32.mrb[0].mxu0
      %v843 = vpop.f32.mrb[0].mxu0
      %v844 = vadd.f32 0.0, %v843
      %v845 = vpop.f32.mrb[0].mxu0
      %846 = vmatprep.mubr.bf16.mxu0 0
      %847 = vmatmul.mubr.bf16.gmra.mrb[0].mxu0 %v742
      %v848 = vpop.f32.mrb[0].mxu0
      %v849 = vadd.f32 0.0, %v848
      %v850 = vpop.f32.mrb[0].mxu0
      %v851 = vpop.f32.mrb[0].mxu0
      %v852 = vadd.f32 0.0, %v851
      %v853 = vpop.f32.mrb[0].mxu0
      %854 = vdwg.mxu0
      %v855 = vadd.f32 %v702, %v788
      %v856 = vadd.f32 %v703, %v790
      %v857 = vadd.f32 %v704, %v841
      %v858 = vadd.f32 %v705, %v792
      %v859 = vadd.f32 %v706, %v794
      %v860 = vadd.f32 %v707, %v844
      %v861 = vadd.f32 %v708, %v798
      %v862 = vadd.f32 %v709, %v800
      %v863 = vadd.f32 %v710, %v849
      %v864 = vadd.f32 %v711, %v802
      %v865 = vadd.f32 %v712, %v804
      %v866 = vadd.f32 %v713, %v852
      %s867 = scalar_lea.vmem %s1, 64
      %v868 = vld [vmem:[%s867] sm:$0xf]
      %v869 = vld [vmem:[%s867 + $0x4] sm:$0xf]
      %v870 = vld [vmem:[%s867 + $0x8] sm:$0xf]
      %v871 = vld [vmem:[%s867 + $0xc] sm:$0xf]
      %v876 = vunpack.c.l.b16 %v868
      %v877 = vunpack.c.l.b16 %v869
      %v878 = vunpack.c.l.b16 %v870
      %v879 = vunpack.c.l.b16 %v871
      %v880 = vpack.c.b16 %v877, %v876
      %v881 = vpack.c.b16 %v879, %v878
      %882 = vrot.lane.b32.xlu0 %v297, 109
      %v883 = vpop.permute.xlu0 %882
      %884 = vrot.lane.b32.xlu0 %v305, 109
      %v885 = vpop.permute.xlu0 %884
      %886 = vrot.lane.b32.xlu0 %v304, 109
      %v887 = vpop.permute.xlu0 %886
      %vm888 = vcmask 891904
      %v889 = vsel %vm888, %v883, %v885
      %v890 = vsel %vm888, %v885, %v887
      %v892 = vsel %vm315, %v880, 0
      %v895 = vsel %vm315, %v881, 0
      %v898 = vsel %vm322, %v889, 0
      %v901 = vsel %vm322, %v890, 0
      %v904 = vsel %vm322, %v887, 0
      %906 = vmatprep.subr.bf16.mxu0 %v901
      %907 = vmatpush1.bf16.msra.mxu0 %v898
      %908 = vmatprep.subr.bf16.mxu0 0
      %909 = vmatpush1.bf16.msra.mxu0 0
      %910 = vmatprep.subr.bf16.mxu0 0
      %911 = vmatpush1.bf16.msra.mxu0 0
      %912 = vmatprep.subr.bf16.mxu0 0
      %913 = vmatpush1.bf16.msra.mxu0 0
      %914 = vmatprep.subr.bf16.mxu0 0
      %915 = vmatpush1.bf16.msra.mxu0 0
      %916 = vmatprep.subr.bf16.mxu0 0
      %917 = vmatpush1.bf16.msra.mxu0 0
      %918 = vmatprep.subr.bf16.mxu0 0
      %919 = vmatpush1.bf16.msra.mxu0 0
      %920 = vmatprep.subr.bf16.mxu0 0
      %921 = vmatpush1.bf16.msra.mxu0 0
      %922 = vmatprep.subr.bf16.mxu0 0
      %923 = vmatpush1.bf16.msra.mxu0 0
      %924 = vmatprep.subr.bf16.mxu0 0
      %925 = vmatpush1.bf16.msra.mxu0 0
      %926 = vmatprep.subr.bf16.mxu0 0
      %927 = vmatpush1.bf16.msra.mxu0 0
      %928 = vmatprep.subr.bf16.mxu0 0
      %929 = vmatpush1.bf16.msra.mxu0 0
      %930 = vmatprep.subr.bf16.mxu0 0
      %931 = vmatpush1.bf16.msra.mxu0 0
      %932 = vmatprep.subr.bf16.mxu0 0
      %933 = vmatpush1.bf16.msra.mxu0 0
      %934 = vmatprep.subr.bf16.mxu0 0
      %935 = vmatpush1.bf16.msra.mxu0 0
      %936 = vmatprep.subr.bf16.mxu0 0
      %937 = vmatpush1.bf16.msra.mxu0 0
      %938 = vmatprep.mubr.bf16.mxu0 0
      %939 = vmatmul.mubr.bf16.gmra.mrb[0].mxu0 %v892
      %v940 = vpop.f32.mrb[0].mxu0
      %v941 = vadd.f32 0.0, %v940
      %v942 = vpop.f32.mrb[0].mxu0
      %v943 = vadd.f32 0.0, %v942
      %v944 = vpop.f32.mrb[0].mxu0
      %v945 = vadd.f32 0.0, %v944
      %v946 = vpop.f32.mrb[0].mxu0
      %v947 = vadd.f32 0.0, %v946
      %948 = vmatprep.mubr.bf16.mxu0 0
      %949 = vmatmul.mubr.bf16.gmra.mrb[0].mxu0 %v895
      %v950 = vpop.f32.mrb[0].mxu0
      %v951 = vadd.f32 0.0, %v950
      %v952 = vpop.f32.mrb[0].mxu0
      %v953 = vadd.f32 0.0, %v952
      %v954 = vpop.f32.mrb[0].mxu0
      %v955 = vadd.f32 0.0, %v954
      %v956 = vpop.f32.mrb[0].mxu0
      %v957 = vadd.f32 0.0, %v956
      %958 = vdwg.mxu0
      %959 = vmatprep.subr.bf16.mxu0 0
      %960 = vmatpush1.bf16.msra.mxu0 %v904
      %961 = vmatprep.subr.bf16.mxu0 0
      %962 = vmatpush1.bf16.msra.mxu0 0
      %963 = vmatprep.subr.bf16.mxu0 0
      %964 = vmatpush1.bf16.msra.mxu0 0
      %965 = vmatprep.subr.bf16.mxu0 0
      %966 = vmatpush1.bf16.msra.mxu0 0
      %967 = vmatprep.subr.bf16.mxu0 0
      %968 = vmatpush1.bf16.msra.mxu0 0
      %969 = vmatprep.subr.bf16.mxu0 0
      %970 = vmatpush1.bf16.msra.mxu0 0
      %971 = vmatprep.subr.bf16.mxu0 0
      %972 = vmatpush1.bf16.msra.mxu0 0
      %973 = vmatprep.subr.bf16.mxu0 0
      %974 = vmatpush1.bf16.msra.mxu0 0
      %975 = vmatprep.subr.bf16.mxu0 0
      %976 = vmatpush1.bf16.msra.mxu0 0
      %977 = vmatprep.subr.bf16.mxu0 0
      %978 = vmatpush1.bf16.msra.mxu0 0
      %979 = vmatprep.subr.bf16.mxu0 0
      %980 = vmatpush1.bf16.msra.mxu0 0
      %981 = vmatprep.subr.bf16.mxu0 0
      %982 = vmatpush1.bf16.msra.mxu0 0
      %983 = vmatprep.subr.bf16.mxu0 0
      %984 = vmatpush1.bf16.msra.mxu0 0
      %985 = vmatprep.subr.bf16.mxu0 0
      %986 = vmatpush1.bf16.msra.mxu0 0
      %987 = vmatprep.subr.bf16.mxu0 0
      %988 = vmatpush1.bf16.msra.mxu0 0
      %989 = vmatprep.subr.bf16.mxu0 0
      %990 = vmatpush1.bf16.msra.mxu0 0
      %991 = vmatprep.mubr.bf16.mxu0 0
      %992 = vmatmul.mubr.bf16.gmra.mrb[0].mxu0 %v892
      %v993 = vpop.f32.mrb[0].mxu0
      %v994 = vadd.f32 0.0, %v993
      %v995 = vpop.f32.mrb[0].mxu0
      %v996 = vpop.f32.mrb[0].mxu0
      %v997 = vadd.f32 0.0, %v996
      %v998 = vpop.f32.mrb[0].mxu0
      %999 = vmatprep.mubr.bf16.mxu0 0
      %1000 = vmatmul.mubr.bf16.gmra.mrb[0].mxu0 %v895
      %v1001 = vpop.f32.mrb[0].mxu0
      %v1002 = vadd.f32 0.0, %v1001
      %v1003 = vpop.f32.mrb[0].mxu0
      %v1004 = vpop.f32.mrb[0].mxu0
      %v1005 = vadd.f32 0.0, %v1004
      %v1006 = vpop.f32.mrb[0].mxu0
      %1007 = vdwg.mxu0
      %v1008 = vadd.f32 %v855, %v941
      %v1009 = vadd.f32 %v856, %v943
      %v1010 = vadd.f32 %v857, %v994
      %v1011 = vadd.f32 %v858, %v945
      %v1012 = vadd.f32 %v859, %v947
      %v1013 = vadd.f32 %v860, %v997
      %v1014 = vadd.f32 %v861, %v951
      %v1015 = vadd.f32 %v862, %v953
      %v1016 = vadd.f32 %v863, %v1002
      %v1017 = vadd.f32 %v864, %v955
      %v1018 = vadd.f32 %v865, %v957
      %v1019 = vadd.f32 %v866, %v1005
      %s1020 = scalar_lea.vmem %s1, 80
      %v1021 = vld [vmem:[%s1020] sm:$0xf]
      %v1022 = vld [vmem:[%s1020 + $0x4] sm:$0xf]
      %v1023 = vld [vmem:[%s1020 + $0x8] sm:$0xf]
      %v1024 = vld [vmem:[%s1020 + $0xc] sm:$0xf]
      %v1029 = vunpack.c.l.b16 %v1021
      %v1030 = vunpack.c.l.b16 %v1022
      %v1031 = vunpack.c.l.b16 %v1023
      %v1032 = vunpack.c.l.b16 %v1024
      %v1033 = vpack.c.b16 %v1030, %v1029
      %v1034 = vpack.c.b16 %v1032, %v1031
      %1035 = vrot.lane.b32.xlu0 %v297, 108
      %v1036 = vpop.permute.xlu0 %1035
      %1037 = vrot.lane.b32.xlu0 %v305, 108
      %v1038 = vpop.permute.xlu0 %1037
      %1039 = vrot.lane.b32.xlu0 %v304, 108
      %v1040 = vpop.permute.xlu0 %1039
      %vm1041 = vcmask 883712
      %v1042 = vsel %vm1041, %v1036, %v1038
      %v1043 = vsel %vm1041, %v1038, %v1040
      %v1045 = vsel %vm315, %v1033, 0
      %v1048 = vsel %vm315, %v1034, 0
      %v1051 = vsel %vm322, %v1042, 0
      %v1054 = vsel %vm322, %v1043, 0
      %v1057 = vsel %vm322, %v1040, 0
      %1059 = vmatprep.subr.bf16.mxu0 %v1054
      %1060 = vmatpush1.bf16.msra.mxu0 %v1051
      %1061 = vmatprep.subr.bf16.mxu0 0
      %1062 = vmatpush1.bf16.msra.mxu0 0
      %1063 = vmatprep.subr.bf16.mxu0 0
      %1064 = vmatpush1.bf16.msra.mxu0 0
      %1065 = vmatprep.subr.bf16.mxu0 0
      %1066 = vmatpush1.bf16.msra.mxu0 0
      %1067 = vmatprep.subr.bf16.mxu0 0
      %1068 = vmatpush1.bf16.msra.mxu0 0
      %1069 = vmatprep.subr.bf16.mxu0 0
      %1070 = vmatpush1.bf16.msra.mxu0 0
      %1071 = vmatprep.subr.bf16.mxu0 0
      %1072 = vmatpush1.bf16.msra.mxu0 0
      %1073 = vmatprep.subr.bf16.mxu0 0
      %1074 = vmatpush1.bf16.msra.mxu0 0
      %1075 = vmatprep.subr.bf16.mxu0 0
      %1076 = vmatpush1.bf16.msra.mxu0 0
      %1077 = vmatprep.subr.bf16.mxu0 0
      %1078 = vmatpush1.bf16.msra.mxu0 0
      %1079 = vmatprep.subr.bf16.mxu0 0
      %1080 = vmatpush1.bf16.msra.mxu0 0
      %1081 = vmatprep.subr.bf16.mxu0 0
      %1082 = vmatpush1.bf16.msra.mxu0 0
      %1083 = vmatprep.subr.bf16.mxu0 0
      %1084 = vmatpush1.bf16.msra.mxu0 0
      %1085 = vmatprep.subr.bf16.mxu0 0
      %1086 = vmatpush1.bf16.msra.mxu0 0
      %1087 = vmatprep.subr.bf16.mxu0 0
      %1088 = vmatpush1.bf16.msra.mxu0 0
      %1089 = vmatprep.subr.bf16.mxu0 0
      %1090 = vmatpush1.bf16.msra.mxu0 0
      %1091 = vmatprep.mubr.bf16.mxu0 0
      %1092 = vmatmul.mubr.bf16.gmra.mrb[0].mxu0 %v1045
      %v1093 = vpop.f32.mrb[0].mxu0
      %v1094 = vadd.f32 0.0, %v1093
      %v1095 = vpop.f32.mrb[0].mxu0
      %v1096 = vadd.f32 0.0, %v1095
      %v1097 = vpop.f32.mrb[0].mxu0
      %v1098 = vadd.f32 0.0, %v1097
      %v1099 = vpop.f32.mrb[0].mxu0
      %v1100 = vadd.f32 0.0, %v1099
      %1101 = vmatprep.mubr.bf16.mxu0 0
      %1102 = vmatmul.mubr.bf16.gmra.mrb[0].mxu0 %v1048
      %v1103 = vpop.f32.mrb[0].mxu0
      %v1104 = vadd.f32 0.0, %v1103
      %v1105 = vpop.f32.mrb[0].mxu0
      %v1106 = vadd.f32 0.0, %v1105
      %v1107 = vpop.f32.mrb[0].mxu0
      %v1108 = vadd.f32 0.0, %v1107
      %v1109 = vpop.f32.mrb[0].mxu0
      %v1110 = vadd.f32 0.0, %v1109
      %1111 = vdwg.mxu0
      %1112 = vmatprep.subr.bf16.mxu0 0
      %1113 = vmatpush1.bf16.msra.mxu0 %v1057
      %1114 = vmatprep.subr.bf16.mxu0 0
      %1115 = vmatpush1.bf16.msra.mxu0 0
      %1116 = vmatprep.subr.bf16.mxu0 0
      %1117 = vmatpush1.bf16.msra.mxu0 0
      %1118 = vmatprep.subr.bf16.mxu0 0
      %1119 = vmatpush1.bf16.msra.mxu0 0
      %1120 = vmatprep.subr.bf16.mxu0 0
      %1121 = vmatpush1.bf16.msra.mxu0 0
      %1122 = vmatprep.subr.bf16.mxu0 0
      %1123 = vmatpush1.bf16.msra.mxu0 0
      %1124 = vmatprep.subr.bf16.mxu0 0
      %1125 = vmatpush1.bf16.msra.mxu0 0
      %1126 = vmatprep.subr.bf16.mxu0 0
      %1127 = vmatpush1.bf16.msra.mxu0 0
      %1128 = vmatprep.subr.bf16.mxu0 0
      %1129 = vmatpush1.bf16.msra.mxu0 0
      %1130 = vmatprep.subr.bf16.mxu0 0
      %1131 = vmatpush1.bf16.msra.mxu0 0
      %1132 = vmatprep.subr.bf16.mxu0 0
      %1133 = vmatpush1.bf16.msra.mxu0 0
      %1134 = vmatprep.subr.bf16.mxu0 0
      %1135 = vmatpush1.bf16.msra.mxu0 0
      %1136 = vmatprep.subr.bf16.mxu0 0
      %1137 = vmatpush1.bf16.msra.mxu0 0
      %1138 = vmatprep.subr.bf16.mxu0 0
      %1139 = vmatpush1.bf16.msra.mxu0 0
      %1140 = vmatprep.subr.bf16.mxu0 0
      %1141 = vmatpush1.bf16.msra.mxu0 0
      %1142 = vmatprep.subr.bf16.mxu0 0
      %1143 = vmatpush1.bf16.msra.mxu0 0
      %1144 = vmatprep.mubr.bf16.mxu0 0
      %1145 = vmatmul.mubr.bf16.gmra.mrb[0].mxu0 %v1045
      %v1146 = vpop.f32.mrb[0].mxu0
      %v1147 = vadd.f32 0.0, %v1146
      %v1148 = vpop.f32.mrb[0].mxu0
      %v1149 = vpop.f32.mrb[0].mxu0
      %v1150 = vadd.f32 0.0, %v1149
      %v1151 = vpop.f32.mrb[0].mxu0
      %1152 = vmatprep.mubr.bf16.mxu0 0
      %1153 = vmatmul.mubr.bf16.gmra.mrb[0].mxu0 %v1048
      %v1154 = vpop.f32.mrb[0].mxu0
      %v1155 = vadd.f32 0.0, %v1154
      %v1156 = vpop.f32.mrb[0].mxu0
      %v1157 = vpop.f32.mrb[0].mxu0
      %v1158 = vadd.f32 0.0, %v1157
      %v1159 = vpop.f32.mrb[0].mxu0
      %1160 = vdwg.mxu0
      %v1161 = vadd.f32 %v1008, %v1094
      %v1162 = vadd.f32 %v1009, %v1096
      %v1163 = vadd.f32 %v1010, %v1147
      %v1164 = vadd.f32 %v1011, %v1098
      %v1165 = vadd.f32 %v1012, %v1100
      %v1166 = vadd.f32 %v1013, %v1150
      %v1167 = vadd.f32 %v1014, %v1104
      %v1168 = vadd.f32 %v1015, %v1106
      %v1169 = vadd.f32 %v1016, %v1155
      %v1170 = vadd.f32 %v1017, %v1108
      %v1171 = vadd.f32 %v1018, %v1110
      %v1172 = vadd.f32 %v1019, %v1158
      %1177 = vrot.lane.b32.xlu0 %v1161, 126
      %v1178 = vpop.permute.xlu0 %1177
      %1179 = vrot.lane.b32.xlu0 %v1164, 126
      %v1180 = vpop.permute.xlu0 %1179
      %1181 = vrot.lane.b32.xlu0 %v1167, 126
      %v1182 = vpop.permute.xlu0 %1181
      %1183 = vrot.lane.b32.xlu0 %v1170, 126
      %v1184 = vpop.permute.xlu0 %1183
      %1189 = vrot.lane.b32.xlu0 %v1161, 124
      %v1190 = vpop.permute.xlu0 %1189
      %1191 = vrot.lane.b32.xlu0 %v1164, 124
      %v1192 = vpop.permute.xlu0 %1191
      %1193 = vrot.lane.b32.xlu0 %v1167, 124
      %v1194 = vpop.permute.xlu0 %1193
      %1195 = vrot.lane.b32.xlu0 %v1170, 124
      %v1196 = vpop.permute.xlu0 %1195
      %1201 = vrot.lane.b32.xlu0 %v1161, 122
      %v1202 = vpop.permute.xlu0 %1201
      %1203 = vrot.lane.b32.xlu0 %v1164, 122
      %v1204 = vpop.permute.xlu0 %1203
      %1205 = vrot.lane.b32.xlu0 %v1167, 122
      %v1206 = vpop.permute.xlu0 %1205
      %1207 = vrot.lane.b32.xlu0 %v1170, 122
      %v1208 = vpop.permute.xlu0 %1207
      %1213 = vrot.lane.b32.xlu0 %v1161, 120
      %v1214 = vpop.permute.xlu0 %1213
      %1215 = vrot.lane.b32.xlu0 %v1164, 120
      %v1216 = vpop.permute.xlu0 %1215
      %1217 = vrot.lane.b32.xlu0 %v1167, 120
      %v1218 = vpop.permute.xlu0 %1217
      %1219 = vrot.lane.b32.xlu0 %v1170, 120
      %v1220 = vpop.permute.xlu0 %1219
      %1225 = vrot.lane.b32.xlu0 %v1161, 118
      %v1226 = vpop.permute.xlu0 %1225
      %1227 = vrot.lane.b32.xlu0 %v1164, 118
      %v1228 = vpop.permute.xlu0 %1227
      %1229 = vrot.lane.b32.xlu0 %v1167, 118
      %v1230 = vpop.permute.xlu0 %1229
      %1231 = vrot.lane.b32.xlu0 %v1170, 118
      %v1232 = vpop.permute.xlu0 %1231
      %1237 = vrot.lane.b32.xlu0 %v1161, 116
      %v1238 = vpop.permute.xlu0 %1237
      %1239 = vrot.lane.b32.xlu0 %v1164, 116
      %v1240 = vpop.permute.xlu0 %1239
      %1241 = vrot.lane.b32.xlu0 %v1167, 116
      %v1242 = vpop.permute.xlu0 %1241
      %1243 = vrot.lane.b32.xlu0 %v1170, 116
      %v1244 = vpop.permute.xlu0 %1243
      %1253 = vrot.lane.b32.xlu0 %v1161, 114
      %v1254 = vpop.permute.xlu0 %1253
      %1255 = vrot.lane.b32.xlu0 %v1162, 114
      %v1256 = vpop.permute.xlu0 %1255
      %1257 = vrot.lane.b32.xlu0 %v1164, 114
      %v1258 = vpop.permute.xlu0 %1257
      %1259 = vrot.lane.b32.xlu0 %v1165, 114
      %v1260 = vpop.permute.xlu0 %1259
      %1261 = vrot.lane.b32.xlu0 %v1167, 114
      %v1262 = vpop.permute.xlu0 %1261
      %1263 = vrot.lane.b32.xlu0 %v1168, 114
      %v1264 = vpop.permute.xlu0 %1263
      %1265 = vrot.lane.b32.xlu0 %v1170, 114
      %v1266 = vpop.permute.xlu0 %1265
      %1267 = vrot.lane.b32.xlu0 %v1171, 114
      %v1268 = vpop.permute.xlu0 %1267
      %vm1269 = vcmask 932864
      %v1270 = vsel %vm1269, %v1254, %v1256
      %v1271 = vsel %vm1269, %v1258, %v1260
      %v1272 = vsel %vm1269, %v1262, %v1264
      %v1273 = vsel %vm1269, %v1266, %v1268
      %1278 = vrot.lane.b32.xlu0 %v1162, 112
      %v1279 = vpop.permute.xlu0 %1278
      %1280 = vrot.lane.b32.xlu0 %v1165, 112
      %v1281 = vpop.permute.xlu0 %1280
      %1282 = vrot.lane.b32.xlu0 %v1168, 112
      %v1283 = vpop.permute.xlu0 %1282
      %1284 = vrot.lane.b32.xlu0 %v1171, 112
      %v1285 = vpop.permute.xlu0 %1284
      %1290 = vrot.lane.b32.xlu0 %v1162, 110
      %v1291 = vpop.permute.xlu0 %1290
      %1292 = vrot.lane.b32.xlu0 %v1165, 110
      %v1293 = vpop.permute.xlu0 %1292
      %1294 = vrot.lane.b32.xlu0 %v1168, 110
      %v1295 = vpop.permute.xlu0 %1294
      %1296 = vrot.lane.b32.xlu0 %v1171, 110
      %v1297 = vpop.permute.xlu0 %1296
      %1302 = vrot.lane.b32.xlu0 %v1162, 108
      %v1303 = vpop.permute.xlu0 %1302
      %1304 = vrot.lane.b32.xlu0 %v1165, 108
      %v1305 = vpop.permute.xlu0 %1304
      %1306 = vrot.lane.b32.xlu0 %v1168, 108
      %v1307 = vpop.permute.xlu0 %1306
      %1308 = vrot.lane.b32.xlu0 %v1171, 108
      %v1309 = vpop.permute.xlu0 %1308
      %1314 = vrot.lane.b32.xlu0 %v1162, 106
      %v1315 = vpop.permute.xlu0 %1314
      %1316 = vrot.lane.b32.xlu0 %v1165, 106
      %v1317 = vpop.permute.xlu0 %1316
      %1318 = vrot.lane.b32.xlu0 %v1168, 106
      %v1319 = vpop.permute.xlu0 %1318
      %1320 = vrot.lane.b32.xlu0 %v1171, 106
      %v1321 = vpop.permute.xlu0 %1320
      %1326 = vrot.lane.b32.xlu0 %v1162, 104
      %v1327 = vpop.permute.xlu0 %1326
      %1328 = vrot.lane.b32.xlu0 %v1165, 104
      %v1329 = vpop.permute.xlu0 %1328
      %1330 = vrot.lane.b32.xlu0 %v1168, 104
      %v1331 = vpop.permute.xlu0 %1330
      %1332 = vrot.lane.b32.xlu0 %v1171, 104
      %v1333 = vpop.permute.xlu0 %1332
      %1338 = vrot.lane.b32.xlu0 %v1162, 102
      %v1339 = vpop.permute.xlu0 %1338
      %1340 = vrot.lane.b32.xlu0 %v1165, 102
      %v1341 = vpop.permute.xlu0 %1340
      %1342 = vrot.lane.b32.xlu0 %v1168, 102
      %v1343 = vpop.permute.xlu0 %1342
      %1344 = vrot.lane.b32.xlu0 %v1171, 102
      %v1345 = vpop.permute.xlu0 %1344
      %1354 = vrot.lane.b32.xlu0 %v1162, 100
      %v1355 = vpop.permute.xlu0 %1354
      %1356 = vrot.lane.b32.xlu0 %v1163, 100
      %v1357 = vpop.permute.xlu0 %1356
      %1358 = vrot.lane.b32.xlu0 %v1165, 100
      %v1359 = vpop.permute.xlu0 %1358
      %1360 = vrot.lane.b32.xlu0 %v1166, 100
      %v1361 = vpop.permute.xlu0 %1360
      %1362 = vrot.lane.b32.xlu0 %v1168, 100
      %v1363 = vpop.permute.xlu0 %1362
      %1364 = vrot.lane.b32.xlu0 %v1169, 100
      %v1365 = vpop.permute.xlu0 %1364
      %1366 = vrot.lane.b32.xlu0 %v1171, 100
      %v1367 = vpop.permute.xlu0 %1366
      %1368 = vrot.lane.b32.xlu0 %v1172, 100
      %v1369 = vpop.permute.xlu0 %1368
      %vm1370 = vcmask 818176
      %v1371 = vsel %vm1370, %v1355, %v1357
      %v1372 = vsel %vm1370, %v1359, %v1361
      %v1373 = vsel %vm1370, %v1363, %v1365
      %v1374 = vsel %vm1370, %v1367, %v1369
      %1379 = vrot.lane.b32.xlu0 %v1163, 98
      %v1380 = vpop.permute.xlu0 %1379
      %1381 = vrot.lane.b32.xlu0 %v1166, 98
      %v1382 = vpop.permute.xlu0 %1381
      %1383 = vrot.lane.b32.xlu0 %v1169, 98
      %v1384 = vpop.permute.xlu0 %1383
      %1385 = vrot.lane.b32.xlu0 %v1172, 98
      %v1386 = vpop.permute.xlu0 %1385
      %vm1391 = vcmask 130048
      %v1392 = vsel %vm1391, %v1161, %v1178
      %v1393 = vsel %vm1391, %v1164, %v1180
      %v1394 = vsel %vm1391, %v1167, %v1182
      %v1395 = vsel %vm1391, %v1170, %v1184
      %vm1396 = vcmask 261120
      %v1397 = vsel %vm1396, %v1392, %v1190
      %v1398 = vsel %vm1396, %v1393, %v1192
      %v1399 = vsel %vm1396, %v1394, %v1194
      %v1400 = vsel %vm1396, %v1395, %v1196
      %vm1401 = vcmask 392192
      %v1402 = vsel %vm1401, %v1397, %v1202
      %v1403 = vsel %vm1401, %v1398, %v1204
      %v1404 = vsel %vm1401, %v1399, %v1206
      %v1405 = vsel %vm1401, %v1400, %v1208
      %vm1406 = vcmask 523264
      %v1407 = vsel %vm1406, %v1402, %v1214
      %v1408 = vsel %vm1406, %v1403, %v1216
      %v1409 = vsel %vm1406, %v1404, %v1218
      %v1410 = vsel %vm1406, %v1405, %v1220
      %vm1411 = vcmask 654336
      %v1412 = vsel %vm1411, %v1407, %v1226
      %v1413 = vsel %vm1411, %v1408, %v1228
      %v1414 = vsel %vm1411, %v1409, %v1230
      %v1415 = vsel %vm1411, %v1410, %v1232
      %vm1416 = vcmask 785408
      %v1417 = vsel %vm1416, %v1412, %v1238
      %v1418 = vsel %vm1416, %v1413, %v1240
      %v1419 = vsel %vm1416, %v1414, %v1242
      %v1420 = vsel %vm1416, %v1415, %v1244
      %vm1421 = vcmask 916480
      %v1422 = vsel %vm1421, %v1417, %v1270
      %v1423 = vsel %vm1421, %v1418, %v1271
      %v1424 = vsel %vm1421, %v1419, %v1272
      %v1425 = vsel %vm1421, %v1420, %v1273
      %v1426 = vsel %vm1391, %v1279, %v1291
      %v1427 = vsel %vm1391, %v1281, %v1293
      %v1428 = vsel %vm1391, %v1283, %v1295
      %v1429 = vsel %vm1391, %v1285, %v1297
      %v1430 = vsel %vm1396, %v1426, %v1303
      %v1431 = vsel %vm1396, %v1427, %v1305
      %v1432 = vsel %vm1396, %v1428, %v1307
      %v1433 = vsel %vm1396, %v1429, %v1309
      %v1434 = vsel %vm1401, %v1430, %v1315
      %v1435 = vsel %vm1401, %v1431, %v1317
      %v1436 = vsel %vm1401, %v1432, %v1319
      %v1437 = vsel %vm1401, %v1433, %v1321
      %v1438 = vsel %vm1406, %v1434, %v1327
      %v1439 = vsel %vm1406, %v1435, %v1329
      %v1440 = vsel %vm1406, %v1436, %v1331
      %v1441 = vsel %vm1406, %v1437, %v1333
      %v1442 = vsel %vm1411, %v1438, %v1339
      %v1443 = vsel %vm1411, %v1439, %v1341
      %v1444 = vsel %vm1411, %v1440, %v1343
      %v1445 = vsel %vm1411, %v1441, %v1345
      %v1446 = vsel %vm1416, %v1442, %v1371
      %v1447 = vsel %vm1416, %v1443, %v1372
      %v1448 = vsel %vm1416, %v1444, %v1373
      %v1449 = vsel %vm1416, %v1445, %v1374
      %v1450 = vsel %vm1421, %v1446, %v1380
      %v1451 = vsel %vm1421, %v1447, %v1382
      %v1452 = vsel %vm1421, %v1448, %v1384
      %v1453 = vsel %vm1421, %v1449, %v1386
      %1455 = vset.pattern.permute.xlu0 0
      %1456 = vperm.xlu0 %1455, %v253
      %v1457 = vpop.permute.xlu0 %1456
      %1460 = vset.pattern.permute.xlu0 0
      %1461 = vperm.xlu0 %1460, %v254
      %v1462 = vpop.permute.xlu0 %1461
      %1465 = vset.pattern.permute.xlu0 0
      %1466 = vperm.xlu0 %1465, %v255
      %v1467 = vpop.permute.xlu0 %1466
      %1470 = vset.pattern.permute.xlu0 0
      %1471 = vperm.xlu0 %1470, %v256
      %v1472 = vpop.permute.xlu0 %1471
      %v1474 = vadd.f32 %v1422, %v1457
      %v1475 = vadd.f32 %v1450, %v1457
      %v1476 = vadd.f32 %v1423, %v1462
      %v1477 = vadd.f32 %v1451, %v1462
      %v1478 = vadd.f32 %v1424, %v1467
      %v1479 = vadd.f32 %v1452, %v1467
      %v1480 = vadd.f32 %v1425, %v1472
      %v1481 = vadd.f32 %v1453, %v1472
      %v1482 = vadd.f32 %v1474, %v1475
      %1483 = vadd.xlane.f32.xlu0 %v1482
      %v1484 = vpop.xlane.xlu0 %1483
      %v1485 = vadd.f32 %v1476, %v1477
      %1486 = vadd.xlane.f32.xlu0 %v1485
      %v1487 = vpop.xlane.xlu0 %1486
      %v1488 = vadd.f32 %v1478, %v1479
      %1489 = vadd.xlane.f32.xlu0 %v1488
      %v1490 = vpop.xlane.xlu0 %1489
      %v1491 = vadd.f32 %v1480, %v1481
      %1492 = vadd.xlane.f32.xlu0 %v1491
      %v1493 = vpop.xlane.xlu0 %1492
      %v1494 = vmul.f32 %v1474, %v1474
      %v1495 = vmul.f32 %v1475, %v1475
      %v1496 = vmul.f32 %v1476, %v1476
      %v1497 = vmul.f32 %v1477, %v1477
      %v1498 = vmul.f32 %v1478, %v1478
      %v1499 = vmul.f32 %v1479, %v1479
      %v1500 = vmul.f32 %v1480, %v1480
      %v1501 = vmul.f32 %v1481, %v1481
      %v1502 = vadd.f32 %v1494, %v1495
      %1503 = vadd.xlane.f32.xlu0 %v1502
      %v1504 = vpop.xlane.xlu0 %1503
      %v1505 = vadd.f32 %v1496, %v1497
      %1506 = vadd.xlane.f32.xlu0 %v1505
      %v1507 = vpop.xlane.xlu0 %1506
      %v1508 = vadd.f32 %v1498, %v1499
      %1509 = vadd.xlane.f32.xlu0 %v1508
      %v1510 = vpop.xlane.xlu0 %1509
      %v1511 = vadd.f32 %v1500, %v1501
      %1512 = vadd.xlane.f32.xlu0 %v1511
      %v1513 = vpop.xlane.xlu0 %1512
      %vm1514 = vcmask 7168
      %v1515 = vsel %vm1514, %v1484, %v1504
      %v1516 = vsel %vm1514, %v1487, %v1507
      %v1517 = vsel %vm1514, %v1490, %v1510
      %v1518 = vsel %vm1514, %v1493, %v1513
      %v1520 = vsel %vm1396, %v265, 0
      %v1523 = vsel %vm1396, %v266, 0
      %v1526 = vsel %vm1396, %v267, 0
      %v1529 = vsel %vm1396, %v268, 0
      %1531 = vmatprep.subr.mxu0 0.0
      %1532 = vmatpush1.msra.mxu0 %v1515
      %1533 = vmatprep.subr.mxu0 0.0
      %1534 = vmatpush1.msra.mxu0 %v1516
      %1535 = vmatprep.subr.mxu0 0.0
      %1536 = vmatpush1.msra.mxu0 %v1517
      %1537 = vmatprep.subr.mxu0 0.0
      %1538 = vmatpush1.msra.mxu0 %v1518
      %1539 = vmatprep.subr.mxu0 0.0
      %1540 = vmatpush1.msra.mxu0 0.0
      %1541 = vmatprep.subr.mxu0 0.0
      %1542 = vmatpush1.msra.mxu0 0.0
      %1543 = vmatprep.subr.mxu0 0.0
      %1544 = vmatpush1.msra.mxu0 0.0
      %1545 = vmatprep.subr.mxu0 0.0
      %1546 = vmatpush1.msra.mxu0 0.0
      %1547 = vmatprep.subr.mxu0 0.0
      %1548 = vmatpush1.msra.mxu0 0.0
      %1549 = vmatprep.subr.mxu0 0.0
      %1550 = vmatpush1.msra.mxu0 0.0
      %1551 = vmatprep.subr.mxu0 0.0
      %1552 = vmatpush1.msra.mxu0 0.0
      %1553 = vmatprep.subr.mxu0 0.0
      %1554 = vmatpush1.msra.mxu0 0.0
      %1555 = vmatprep.subr.mxu0 0.0
      %1556 = vmatpush1.msra.mxu0 0.0
      %1557 = vmatprep.subr.mxu0 0.0
      %1558 = vmatpush1.msra.mxu0 0.0
      %1559 = vmatprep.subr.mxu0 0.0
      %1560 = vmatpush1.msra.mxu0 0.0
      %1561 = vmatprep.subr.mxu0 0.0
      %1562 = vmatpush1.msra.mxu0 0.0
      %1563 = vmatprep.subr.mxu0 0.0
      %1564 = vmatpush1.msra.mxu0 0.0
      %1565 = vmatprep.subr.mxu0 0.0
      %1566 = vmatpush1.msra.mxu0 0.0
      %1567 = vmatprep.subr.mxu0 0.0
      %1568 = vmatpush1.msra.mxu0 0.0
      %1569 = vmatprep.subr.mxu0 0.0
      %1570 = vmatpush1.msra.mxu0 0.0
      %1571 = vmatprep.subr.mxu0 0.0
      %1572 = vmatpush1.msra.mxu0 0.0
      %1573 = vmatprep.subr.mxu0 0.0
      %1574 = vmatpush1.msra.mxu0 0.0
      %1575 = vmatprep.subr.mxu0 0.0
      %1576 = vmatpush1.msra.mxu0 0.0
      %1577 = vmatprep.subr.mxu0 0.0
      %1578 = vmatpush1.msra.mxu0 0.0
      %1579 = vmatprep.subr.mxu0 0.0
      %1580 = vmatpush1.msra.mxu0 0.0
      %1581 = vmatprep.subr.mxu0 0.0
      %1582 = vmatpush1.msra.mxu0 0.0
      %1583 = vmatprep.subr.mxu0 0.0
      %1584 = vmatpush1.msra.mxu0 0.0
      %1585 = vmatprep.subr.mxu0 0.0
      %1586 = vmatpush1.msra.mxu0 0.0
      %1587 = vmatprep.subr.mxu0 0.0
      %1588 = vmatpush1.msra.mxu0 0.0
      %1589 = vmatprep.subr.mxu0 0.0
      %1590 = vmatpush1.msra.mxu0 0.0
      %1591 = vmatprep.subr.mxu0 0.0
      %1592 = vmatpush1.msra.mxu0 0.0
      %1593 = vmatprep.subr.mxu0 0.0
      %1594 = vmatpush1.msra.mxu0 0.0
      %1595 = vmatprep.mubr.f32.mxu0 0.0
      %1596 = vmatmul.mubr.f32.gmra.mrb[0].mxu0 %v1520
      %v1597 = vpop.f32.mrb[0].mxu0
      %v1598 = vadd.f32 0.0, %v1597
      %v1599 = vpop.f32.mrb[0].mxu0
      %1600 = vmatprep.mubr.f32.mxu0 0.0
      %1601 = vmatmul.mubr.f32.gmra.mrb[0].mxu0 %v1523
      %v1602 = vpop.f32.mrb[0].mxu0
      %v1603 = vadd.f32 0.0, %v1602
      %v1604 = vpop.f32.mrb[0].mxu0
      %1605 = vmatprep.mubr.f32.mxu0 0.0
      %1606 = vmatmul.mubr.f32.gmra.mrb[0].mxu0 %v1526
      %v1607 = vpop.f32.mrb[0].mxu0
      %v1608 = vadd.f32 0.0, %v1607
      %v1609 = vpop.f32.mrb[0].mxu0
      %1610 = vmatprep.mubr.f32.mxu0 0.0
      %1611 = vmatmul.mubr.f32.gmra.mrb[0].mxu0 %v1529
      %v1612 = vpop.f32.mrb[0].mxu0
      %v1613 = vadd.f32 0.0, %v1612
      %v1614 = vpop.f32.mrb[0].mxu0
      %1615 = vdwg.mxu0
      %v1616 = vmul.f32 %v1598, 0.0009765625
      %v1617 = vmul.f32 %v1603, 0.0009765625
      %v1618 = vmul.f32 %v1608, 0.0009765625
      %v1619 = vmul.f32 %v1613, 0.0009765625
      %v1620 = vmul.f32 %v1616, %v1616
      %v1621 = vmul.f32 %v1617, %v1617
      %v1622 = vmul.f32 %v1618, %v1618
      %v1623 = vmul.f32 %v1619, %v1619
      %1628 = vrot.lane.b32.xlu0 %v1620, 1
      %v1629 = vpop.permute.xlu0 %1628
      %1630 = vrot.lane.b32.xlu0 %v1621, 1
      %v1631 = vpop.permute.xlu0 %1630
      %1632 = vrot.lane.b32.xlu0 %v1622, 1
      %v1633 = vpop.permute.xlu0 %1632
      %1634 = vrot.lane.b32.xlu0 %v1623, 1
      %v1635 = vpop.permute.xlu0 %1634
      %v1640 = vsub.f32 %v1616, %v1629
      %v1641 = vsub.f32 %v1617, %v1631
      %v1642 = vsub.f32 %v1618, %v1633
      %v1643 = vsub.f32 %v1619, %v1635
      %v1644 = vmax.f32 %v1640, 0.0
      %v1645 = vmax.f32 %v1641, 0.0
      %v1646 = vmax.f32 %v1642, 0.0
      %v1647 = vmax.f32 %v1643, 0.0
      %1649 = vset.pattern.permute.xlu0 0
      %1650 = vperm.xlu0 %1649, %v1616
      %v1651 = vpop.permute.xlu0 %1650
      %1654 = vset.pattern.permute.xlu0 0
      %1655 = vperm.xlu0 %1654, %v1617
      %v1656 = vpop.permute.xlu0 %1655
      %1659 = vset.pattern.permute.xlu0 0
      %1660 = vperm.xlu0 %1659, %v1618
      %v1661 = vpop.permute.xlu0 %1660
      %1664 = vset.pattern.permute.xlu0 0
      %1665 = vperm.xlu0 %1664, %v1619
      %v1666 = vpop.permute.xlu0 %1665
      %v1668 = vsub.f32 %v1474, %v1651
      %v1669 = vsub.f32 %v1475, %v1651
      %v1670 = vsub.f32 %v1476, %v1656
      %v1671 = vsub.f32 %v1477, %v1656
      %v1672 = vsub.f32 %v1478, %v1661
      %v1673 = vsub.f32 %v1479, %v1661
      %v1674 = vsub.f32 %v1480, %v1666
      %v1675 = vsub.f32 %v1481, %v1666
      %v1676 = vadd.f32 %v1644, 1e-06
      %v1677 = vadd.f32 %v1645, 1e-06
      %v1678 = vadd.f32 %v1646, 1e-06
      %v1679 = vadd.f32 %v1647, 1e-06
      %v1680 = vrsqrt.pop %v1676
      %v1681 = vrsqrt.pop %v1677
      %v1682 = vrsqrt.pop %v1678
      %v1683 = vrsqrt.pop %v1679
      %1685 = vset.pattern.permute.xlu0 1
      %1686 = vperm.xlu0 %1685, %v1680
      %v1687 = vpop.permute.xlu0 %1686
      %1690 = vset.pattern.permute.xlu0 1
      %1691 = vperm.xlu0 %1690, %v1681
      %v1692 = vpop.permute.xlu0 %1691
      %1695 = vset.pattern.permute.xlu0 1
      %1696 = vperm.xlu0 %1695, %v1682
      %v1697 = vpop.permute.xlu0 %1696
      %1700 = vset.pattern.permute.xlu0 1
      %1701 = vperm.xlu0 %1700, %v1683
      %v1702 = vpop.permute.xlu0 %1701
      %v1704 = vmul.f32 %v1668, %v1687
      %v1705 = vmul.f32 %v1669, %v1687
      %v1706 = vmul.f32 %v1670, %v1692
      %v1707 = vmul.f32 %v1671, %v1692
      %v1708 = vmul.f32 %v1672, %v1697
      %v1709 = vmul.f32 %v1673, %v1697
      %v1710 = vmul.f32 %v1674, %v1702
      %v1711 = vmul.f32 %v1675, %v1702
      %1713 = vset.pattern.permute.xlu0 0
      %1714 = vperm.xlu0 %1713, %v257
      %v1715 = vpop.permute.xlu0 %1714
      %1718 = vset.pattern.permute.xlu0 0
      %1719 = vperm.xlu0 %1718, %v258
      %v1720 = vpop.permute.xlu0 %1719
      %1723 = vset.pattern.permute.xlu0 0
      %1724 = vperm.xlu0 %1723, %v259
      %v1725 = vpop.permute.xlu0 %1724
      %1728 = vset.pattern.permute.xlu0 0
      %1729 = vperm.xlu0 %1728, %v260
      %v1730 = vpop.permute.xlu0 %1729
      %v1732 = vmul.f32 %v1704, %v1715
      %v1733 = vmul.f32 %v1705, %v1715
      %v1734 = vmul.f32 %v1706, %v1720
      %v1735 = vmul.f32 %v1707, %v1720
      %v1736 = vmul.f32 %v1708, %v1725
      %v1737 = vmul.f32 %v1709, %v1725
      %v1738 = vmul.f32 %v1710, %v1730
      %v1739 = vmul.f32 %v1711, %v1730
      %1741 = vset.pattern.permute.xlu0 0
      %1742 = vperm.xlu0 %1741, %v261
      %v1743 = vpop.permute.xlu0 %1742
      %1746 = vset.pattern.permute.xlu0 0
      %1747 = vperm.xlu0 %1746, %v262
      %v1748 = vpop.permute.xlu0 %1747
      %1751 = vset.pattern.permute.xlu0 0
      %1752 = vperm.xlu0 %1751, %v263
      %v1753 = vpop.permute.xlu0 %1752
      %1756 = vset.pattern.permute.xlu0 0
      %1757 = vperm.xlu0 %1756, %v264
      %v1758 = vpop.permute.xlu0 %1757
      %v1760 = vadd.f32 %v1732, %v1743
      %v1761 = vadd.f32 %v1733, %v1743
      %v1762 = vadd.f32 %v1734, %v1748
      %v1763 = vadd.f32 %v1735, %v1748
      %v1764 = vadd.f32 %v1736, %v1753
      %v1765 = vadd.f32 %v1737, %v1753
      %v1766 = vadd.f32 %v1738, %v1758
      %v1767 = vadd.f32 %v1739, %v1758
      %1776 = vrot.lane.b32.xlu0 %v1760, 16
      %v1777 = vpop.permute.xlu0 %1776
      %1778 = vrot.lane.b32.xlu0 %v1761, 16
      %v1779 = vpop.permute.xlu0 %1778
      %1780 = vrot.lane.b32.xlu0 %v1762, 16
      %v1781 = vpop.permute.xlu0 %1780
      %1782 = vrot.lane.b32.xlu0 %v1763, 16
      %v1783 = vpop.permute.xlu0 %1782
      %1784 = vrot.lane.b32.xlu0 %v1764, 16
      %v1785 = vpop.permute.xlu0 %1784
      %1786 = vrot.lane.b32.xlu0 %v1765, 16
      %v1787 = vpop.permute.xlu0 %1786
      %1788 = vrot.lane.b32.xlu0 %v1766, 16
      %v1789 = vpop.permute.xlu0 %1788
      %1790 = vrot.lane.b32.xlu0 %v1767, 16
      %v1791 = vpop.permute.xlu0 %1790
      %v1792 = vsel %vm1391, %v1777, %v1779
      %v1793 = vsel %vm1391, %v1781, %v1783
      %v1794 = vsel %vm1391, %v1785, %v1787
      %v1795 = vsel %vm1391, %v1789, %v1791
      %v1804 = vsel %vm1391, 0.0, %v1777
      %v1805 = vsel %vm1391, 0.0, %v1781
      %v1806 = vsel %vm1391, 0.0, %v1785
      %v1807 = vsel %vm1391, 0.0, %v1789
      %v1808 = vpack.c.bf16 %v1805, %v1804
      %v1809 = vpack.c.bf16 %v1793, %v1792
      %v1810 = vpack.c.bf16 %v1807, %v1806
      %v1811 = vpack.c.bf16 %v1795, %v1794
      %v1816 = vunpack.c.l.b16 %v1808
      %v1817 = vunpack.c.l.b16 %v1809
      %v1818 = vunpack.c.h.b16 %v1808
      %v1819 = vunpack.c.h.b16 %v1809
      %v1820 = vunpack.c.l.b16 %v1810
      %v1821 = vunpack.c.l.b16 %v1811
      %v1822 = vunpack.c.h.b16 %v1810
      %v1823 = vunpack.c.h.b16 %v1811
      %v1824 = vpack.c.b16 %v1817, %v1816
      %v1825 = vpack.c.b16 %v1819, %v1818
      %v1826 = vpack.c.b16 %v1821, %v1820
      %v1827 = vpack.c.b16 %v1823, %v1822
      %1832 = vst [vmem:[%s251] sm:$0xff] %v1824
      %1833 = vst [vmem:[%s251 + $0x8] sm:$0xff] %v1825
      %1834 = vst [vmem:[%s251 + $0x10] sm:$0xff] %v1826
      %1835 = vst [vmem:[%s251 + $0x18] sm:$0xff] %v1827
      %p1836 = scmp.lt.s32.totalorder %s17, 1
      %s1837 = scalar_select %p1836, %s17, 1
      %s1838 = smul.addr %s1837, 8
      %s1839 = smul.addr %s1838, 4
      %s1840 = scalar_lea.vmem %s6, %s1839
      // Predicated region
      $region45: #{down_shifted_conv2d.1} parent=43 // pred_check
        %p1841 = pneg %p166
      $region46: #{down_shifted_conv2d.1} parent=43 // pred_check_branch
        %1843 = sbr.rel (%p1841) target = $region48
      $region47: #{down_shifted_conv2d.1} parent=43 // pred_region
        _
      $region48: #{down_shifted_conv2d.1} parent=43 // pred_fallthru
        _
    $region44: #{down_shifted_conv2d.1} parent=5 // pred_fallthru
      _
    %p1844 = scmp.le.s32.totalorder 2, %s12
    // Predicated region
    $region49: #{down_shifted_conv2d.1} parent=5 // pred_check
      %p1845 = pneg %p1844
    $region50: #{down_shifted_conv2d.1} parent=5 // pred_check_branch
      %1847 = sbr.rel (%p1845) target = $region52
    $region51: #{down_shifted_conv2d.1} parent=5 // pred_region
      %s1848 = ssub.s32 %s12, 2
      // Predicated region
      $region53: #{down_shifted_conv2d.1} parent=51 // pred_check
        %p1849 = pneg %p172
      $region54: #{down_shifted_conv2d.1} parent=51 // pred_check_branch
        %1851 = sbr.rel (%p1849) target = $region56
      $region55: #{down_shifted_conv2d.1} parent=51 // pred_region
        %p1852 = scmp.lt.s32.totalorder %s18, 1
        %s1853 = scalar_select %p1852, %s18, 1
        %s1854 = smul.addr %s1853, 8
        %s1855 = smul.addr %s1854, 4
        %s1856 = scalar_lea.vmem %s6, %s1855
      $region56: #{down_shifted_conv2d.1} parent=51 // pred_fallthru
        _
    $region52: #{down_shifted_conv2d.1} parent=5 // pred_fallthru
      _
  $region6: #{down_shifted_conv2d.1} parent=0 // loop_footer
    %s16 = sadd.s32 1, %s12
  $region7: #{down_shifted_conv2d.1} parent=0 // loop_footer_branch
    %11 = sbr.rel target = $region3
  $region8: #{down_shifted_conv2d.1} parent=0 // loop_exit
    _

</llo_original>
